<compile_context>
chip_gen: v5e
topology: v5e:2x2
jax: 0.10.0
libtpu: 0.0.40
codegen_flags: <defaults>
</compile_context>

<pallas_src>
import jax
import jax.numpy as jnp
from jax import lax
from jax.experimental import pallas as pl
from jax.experimental.pallas import tpu as pltpu

JITTER = 1e-4        # gpytorch settings.variational_cholesky_jitter default (float32)
LANE = 128
VMEM_LIMIT = 32 * 1024 * 1024


def _round_up(x, m):
    return (x + m - 1) // m * m


def _cparams(*sem):
    return pltpu.CompilerParams(dimension_semantics=tuple(sem),
                                vmem_limit_bytes=VMEM_LIMIT)


# ---------------------------------------------------------------------------
# Pallas kernel 1: cross RBF  K[i,j] = exp(-0.5 * ||x_i - y_j||^2)
#   (VPU column-wise distance accumulation; D is tiny so no MXU / lane pad)
# ---------------------------------------------------------------------------
def _rbf_cross_body(x_ref, yT_ref, k_ref):
    d2 = jnp.zeros(k_ref.shape, jnp.float32)
    for dd in range(x_ref.shape[-1]):
        diff = x_ref[:, dd:dd + 1] - yT_ref[dd:dd + 1, :]
        d2 = d2 + diff * diff
    k_ref[...] = jnp.exp(-0.5 * d2)


def rbf_cross(x, y, tile_c=LANE):
    """x: (R, D), y: (C, D) -> (R, C_pad) with C_pad = round_up(C, tile_c)."""
    x = x.astype(jnp.float32)
    y = y.astype(jnp.float32)
    R, D = x.shape
    C = y.shape[0]
    C_pad = _round_up(C, tile_c)
    y_pad = jnp.zeros((C_pad, D), jnp.float32).at[:C].set(y)
    yT = y_pad.T                                     # (D, C_pad), lane-dense
    return pl.pallas_call(
        _rbf_cross_body,
        out_shape=jax.ShapeDtypeStruct((R, C_pad), jnp.float32),
        grid=(C_pad // tile_c,),
        in_specs=[pl.BlockSpec((R, D), lambda j: (0, 0)),
                  pl.BlockSpec((D, tile_c), lambda j: (0, j))],
        out_specs=pl.BlockSpec((R, tile_c), lambda j: (0, j)),
        compiler_params=_cparams("parallel"),
    )(x, yT)


# ---------------------------------------------------------------------------
# Pallas kernel 2: tiled predictive covariance
#   covar_block = exp(-0.5*(d2_lat + d2_inp))  +  interp_i^T @ T_j   (MXU)
#   (Kff_lat * Kff_inp fused into a single exp, computed from coordinates)
# ---------------------------------------------------------------------------
def _covar_body(lat_r_ref, latT_c_ref, inp_r_ref, inpT_c_ref, itp_r_ref, t_c_ref,
                cov_ref):
    d2 = jnp.zeros(cov_ref.shape, jnp.float32)
    for dd in range(lat_r_ref.shape[-1]):
        diff = lat_r_ref[:, dd:dd + 1] - latT_c_ref[dd:dd + 1, :]
        d2 = d2 + diff * diff
    for dd in range(inp_r_ref.shape[-1]):
        diff = inp_r_ref[:, dd:dd + 1] - inpT_c_ref[dd:dd + 1, :]
        d2 = d2 + diff * diff
    kff = jnp.exp(-0.5 * d2)                          # data_data_covar block
    quad = lax.dot_general(itp_r_ref[...], t_c_ref[...],
                           dimension_numbers=(((0,), (0,)), ((), ())),
                           preferred_element_type=jnp.float32)
    cov_ref[...] = kff + quad


# ---------------------------------------------------------------------------
# Pallas kernel 3: predictive mean (lane-dense (1, N) row)
#   mean[n] = sum_a A[a,n] * C[a,n]     with C = m_mat @ B
# ---------------------------------------------------------------------------
def _mean_body(a_ref, c_ref, mean_ref):
    mean_ref[...] = jnp.sum(a_ref[...] * c_ref[...], axis=0, keepdims=True)


# ---------------------------------------------------------------------------
# Forward wrapper
# ---------------------------------------------------------------------------
def kronecker_variational_strategy_forward(latents, inputs, Z_H, Z_X,
                                           inducing_values, variational_covar_S,
                                           jitter_val=JITTER):
    latents = latents.astype(jnp.float32)
    inputs = inputs.astype(jnp.float32)
    Z_H = Z_H.astype(jnp.float32)
    Z_X = Z_X.astype(jnp.float32)

    assert latents.shape[-2] == inputs.shape[-2]
    N, D_H = latents.shape
    _, D_X = inputs.shape
    M_H, M_X = Z_H.shape[0], Z_X.shape[0]
    M = M_H * M_X

    N_pad = _round_up(N, LANE)
    TN = 256 if N_pad % 256 == 0 else LANE            # v7x-safe tile size
    grid_n = N_pad // TN

    latents_pad = jnp.zeros((N_pad, D_H), jnp.float32).at[:N].set(latents)
    inputs_pad = jnp.zeros((N_pad, D_X), jnp.float32).at[:N].set(inputs)

    # cross / inducing covariance blocks (Pallas) ---------------------------
    K_H_uf = rbf_cross(Z_H, latents_pad)               # (M_H, N_pad)
    K_X_uf = rbf_cross(Z_X, inputs_pad)                # (M_X, N_pad)
    K_HH = rbf_cross(Z_H, Z_H)[:, :M_H]                # (M_H, M_H)
    K_XX = rbf_cross(Z_X, Z_X)[:, :M_X]                # (M_X, M_X)

    # small dense linear algebra stays in XLA -------------------------------
    # TODO(synk): psd_safe_cholesky retry-with-jitter loop not replicated; plain cholesky used.
    L_H = jnp.linalg.cholesky(K_HH)
    L_X = jnp.linalg.cholesky(K_XX)
    L_H_inv = jax.scipy.linalg.solve_triangular(
        L_H, jnp.eye(M_H, dtype=jnp.float32), lower=True)
    L_X_inv = jax.scipy.linalg.solve_triangular(
        L_X, jnp.eye(M_X, dtype=jnp.float32), lower=True)

    # Kronecker structure: interp = kron(L_H_inv, L_X_inv) @ Kuf
    #                              = khatri_rao_columns(A, B)
    A = L_H_inv @ K_H_uf                               # (M_H, N_pad)
    B = L_X_inv @ K_X_uf                               # (M_X, N_pad)
    interp = (A[:, None, :] * B[None, :, :]).reshape(M, N_pad)

    S = variational_covar_S.astype(jnp.float32)
    midx = jnp.arange(M)
    middle = S.at[midx, midx].add(-1.0)                # S - I (whitened prior)
    T = middle @ interp                                # (M, N_pad)

    m_mat = inducing_values.astype(jnp.float32).reshape(M_H, M_X)
    C = m_mat @ B                                      # (M_H, N_pad)

    # predictive mean (Pallas, lane-dense (1, N_pad) output) ----------------
    mean_pad = pl.pallas_call(
        _mean_body,
        out_shape=jax.ShapeDtypeStruct((1, N_pad), jnp.float32),
        grid=(grid_n,),
        in_specs=[pl.BlockSpec((M_H, TN), lambda i: (0, i)),
                  pl.BlockSpec((M_H, TN), lambda i: (0, i))],
        out_specs=pl.BlockSpec((1, TN), lambda i: (0, i)),
        compiler_params=_cparams("parallel"),
    )(A, C)

    # predictive covariance (Pallas, 2-D tiled, fused Kff + quad) -----------
    covar_pad = pl.pallas_call(
        _covar_body,
        out_shape=jax.ShapeDtypeStruct((N_pad, N_pad), jnp.float32),
        grid=(grid_n, grid_n),
        in_specs=[pl.BlockSpec((TN, D_H), lambda i, j: (i, 0)),
                  pl.BlockSpec((D_H, TN), lambda i, j: (0, j)),
                  pl.BlockSpec((TN, D_X), lambda i, j: (i, 0)),
                  pl.BlockSpec((D_X, TN), lambda i, j: (0, j)),
                  pl.BlockSpec((M, TN), lambda i, j: (0, i)),
                  pl.BlockSpec((M, TN), lambda i, j: (0, j))],
        out_specs=pl.BlockSpec((TN, TN), lambda i, j: (i, j)),
        compiler_params=_cparams("parallel", "parallel"),
    )(latents_pad, latents_pad.T, inputs_pad, inputs_pad.T, interp, T)

    mean = mean_pad[0, :N]
    covar = covar_pad[:N, :N]
    nidx = jnp.arange(N)
    covar = covar.at[nidx, nidx].add(jnp.float32(jitter_val))   # jitter on diag (wrapper side)
    return mean, covar


# ---------------------------------------------------------------------------
# Pure-JAX reference (for correctness check)
# ---------------------------------------------------------------------------
def _reference(latents, inputs, Z_H, Z_X, inducing_values, S):
    def rbf(x):
        sq = jnp.sum(x * x, axis=-1, keepdims=True)
        d2 = jnp.maximum(sq + sq.T - 2.0 * x @ x.T, 0.0)
        return jnp.exp(-0.5 * d2)

    N = latents.shape[-2]
    M_H, M_X = Z_H.shape[-2], Z_X.shape[-2]
    M = M_H * M_X
    K_lat = rbf(jnp.concatenate([latents, Z_H], axis=-2))
    K_inp = rbf(jnp.concatenate([inputs, Z_X], axis=-2))
    Kuf = (K_lat[N:, :N][:, None, :] * K_inp[N:, :N][None, :, :]).reshape(M, N)
    L_H_inv = jax.scipy.linalg.solve_triangular(
        jnp.linalg.cholesky(K_lat[N:, N:]), jnp.eye(M_H), lower=True)
    L_X_inv = jax.scipy.linalg.solve_triangular(
        jnp.linalg.cholesky(K_inp[N:, N:]), jnp.eye(M_X), lower=True)
    L_inv = jnp.kron(L_H_inv, L_X_inv)
    interp = L_inv @ Kuf
    mean = interp.T @ inducing_values
    covar = (K_lat[:N, :N] * K_inp[:N, :N] + JITTER * jnp.eye(N)
             + interp.T @ (S - jnp.eye(M)) @ interp)
    return mean, covar


if __name__ == "__main__":
    key = jax.random.PRNGKey(0)
    k1, k2, k3, k4, k5, k6, k7 = jax.random.split(key, 7)

    N = 16            # mini-batch size
    M_H, M_X = 4, 8   # latent / input inducing points
    D_H, D_X = 2, 3   # latent / input feature dims
    M = M_H * M_X

    latents = jax.random.normal(k1, (N, D_H), jnp.float32)
    inputs = jax.random.normal(k2, (N, D_X), jnp.float32)
    Z_H = jax.random.normal(k3, (M_H, D_H), jnp.float32)
    Z_X = jax.random.normal(k4, (M_X, D_X), jnp.float32)

    # deterministic CholeskyKroneckerVariationalDistribution parameters
    variational_mean = 0.1 * jax.random.normal(k5, (M,), jnp.float32)
    chol_H = jnp.eye(M_H, dtype=jnp.float32) + 0.05 * jnp.tril(
        jax.random.normal(k6, (M_H, M_H), jnp.float32))
    chol_X = jnp.eye(M_X, dtype=jnp.float32) + 0.05 * jnp.tril(
        jax.random.normal(k7, (M_X, M_X), jnp.float32))
    S = jnp.kron(chol_H @ chol_H.T, chol_X @ chol_X.T)   # variational covariance

    mean, covar = jax.jit(kronecker_variational_strategy_forward)(
        latents, inputs, Z_H, Z_X, variational_mean, S)
    jax.block_until_ready((mean, covar))

    ref_mean, ref_covar = _reference(latents, inputs, Z_H, Z_X, variational_mean, S)
    assert mean.shape == (N,) and covar.shape == (N, N)
    assert jnp.allclose(mean, ref_mean, atol=2e-3, rtol=1e-3)
    assert jnp.allclose(covar, ref_covar, atol=2e-3, rtol=1e-3)

    print("KERNEL_OK")
</pallas_src>

<mosaic_0001>
module attributes {stable_mosaic.version = 11 : i64} {
  func.func @_rbf_cross_body(%arg0: i32, %arg1: memref<4x2xf32, #tpu.memory_space<vmem>>, %arg2: memref<2x128xf32, #tpu.memory_space<vmem>>, %arg3: memref<4x128xf32, #tpu.memory_space<vmem>>) attributes {dimension_semantics = [#tpu.dimension_semantics<parallel>], iteration_bounds = array<i64: 1>, scalar_prefetch = 0 : i64, scratch_operands = 0 : i64, tpu.core_type = #tpu.core_type<tc>, window_params = [{pipeline_mode = #tpu.pipeline_mode<synchronous>, transform_indices = @transform_0, window_bounds = array<i64: 4, 2>}, {transform_indices = @transform_1, window_bounds = array<i64: 2, 128>}, {transform_indices = @transform_2, window_bounds = array<i64: 4, 128>}]} {
    %cst = arith.constant 0.000000e+00 : f32
    %0 = vector.broadcast %cst : f32 to vector<4x128xf32>
    %c0 = arith.constant 0 : index
    %c0_0 = arith.constant 0 : index
    %1 = vector.load %arg1[%c0, %c0_0] : memref<4x2xf32, #tpu.memory_space<vmem>>, vector<4x1xf32>
    %c0_1 = arith.constant 0 : index
    %c0_2 = arith.constant 0 : index
    %2 = vector.load %arg2[%c0_1, %c0_2] : memref<2x128xf32, #tpu.memory_space<vmem>>, vector<1x128xf32>
    %3 = vector.broadcast %1 : vector<4x1xf32> to vector<4x128xf32>
    %4 = vector.broadcast %2 : vector<1x128xf32> to vector<4x128xf32>
    %5 = arith.subf %3, %4 : vector<4x128xf32>
    %6 = arith.mulf %5, %5 : vector<4x128xf32>
    %7 = arith.addf %0, %6 : vector<4x128xf32>
    %c0_3 = arith.constant 0 : index
    %c1 = arith.constant 1 : index
    %8 = vector.load %arg1[%c0_3, %c1] : memref<4x2xf32, #tpu.memory_space<vmem>>, vector<4x1xf32>
    %c1_4 = arith.constant 1 : index
    %c0_5 = arith.constant 0 : index
    %9 = vector.load %arg2[%c1_4, %c0_5] : memref<2x128xf32, #tpu.memory_space<vmem>>, vector<1x128xf32>
    %10 = vector.broadcast %8 : vector<4x1xf32> to vector<4x128xf32>
    %11 = vector.broadcast %9 : vector<1x128xf32> to vector<4x128xf32>
    %12 = arith.subf %10, %11 : vector<4x128xf32>
    %13 = arith.mulf %12, %12 : vector<4x128xf32>
    %14 = arith.addf %7, %13 : vector<4x128xf32>
    %cst_6 = arith.constant -5.000000e-01 : f32
    %15 = vector.broadcast %cst_6 : f32 to vector<4x128xf32>
    %16 = arith.mulf %15, %14 : vector<4x128xf32>
    %17 = math.exp %16 : vector<4x128xf32>
    %c0_7 = arith.constant 0 : index
    %c0_8 = arith.constant 0 : index
    %18 = vector.load %arg3[%c0_7, %c0_8] : memref<4x128xf32, #tpu.memory_space<vmem>>, vector<4x128xf32>
    tpu.vector_store %arg3[%c0_7, %c0_8], %17 {strides = array<i32>} : memref<4x128xf32, #tpu.memory_space<vmem>>, vector<4x128xf32>,
    return
  }
  func.func @transform_0(%arg0: i32) -> (i32, i32) {
    %c0_i32 = arith.constant 0 : i32
    %c0_i32_0 = arith.constant 0 : i32
    %c0_i32_1 = arith.constant 0 : i32
    return %c0_i32, %c0_i32_0 : i32, i32
  }
  func.func @transform_1(%arg0: i32) -> (i32, i32) {
    %c0_i32 = arith.constant 0 : i32
    %c0_i32_0 = arith.constant 0 : i32
    return %c0_i32, %arg0 : i32, i32
  }
  func.func @transform_2(%arg0: i32) -> (i32, i32) {
    %c0_i32 = arith.constant 0 : i32
    %c0_i32_0 = arith.constant 0 : i32
    return %c0_i32, %arg0 : i32, i32
  }
}

module attributes {stable_mosaic.version = 11 : i64} {
  func.func @_rbf_cross_body(%arg0: i32, %arg1: memref<8x3xf32, #tpu.memory_space<vmem>>, %arg2: memref<3x128xf32, #tpu.memory_space<vmem>>, %arg3: memref<8x128xf32, #tpu.memory_space<vmem>>) attributes {dimension_semantics = [#tpu.dimension_semantics<parallel>], iteration_bounds = array<i64: 1>, scalar_prefetch = 0 : i64, scratch_operands = 0 : i64, tpu.core_type = #tpu.core_type<tc>, window_params = [{pipeline_mode = #tpu.pipeline_mode<synchronous>, transform_indices = @transform_0, window_bounds = array<i64: 8, 3>}, {transform_indices = @transform_1, window_bounds = array<i64: 3, 128>}, {transform_indices = @transform_2, window_bounds = array<i64: 8, 128>}]} {
    %cst = arith.constant 0.000000e+00 : f32
    %0 = vector.broadcast %cst : f32 to vector<8x128xf32>
    %c0 = arith.constant 0 : index
    %c0_0 = arith.constant 0 : index
    %1 = vector.load %arg1[%c0, %c0_0] : memref<8x3xf32, #tpu.memory_space<vmem>>, vector<8x1xf32>
    %c0_1 = arith.constant 0 : index
    %c0_2 = arith.constant 0 : index
    %2 = vector.load %arg2[%c0_1, %c0_2] : memref<3x128xf32, #tpu.memory_space<vmem>>, vector<1x128xf32>
    %3 = vector.broadcast %1 : vector<8x1xf32> to vector<8x128xf32>
    %4 = vector.broadcast %2 : vector<1x128xf32> to vector<8x128xf32>
    %5 = arith.subf %3, %4 : vector<8x128xf32>
    %6 = arith.mulf %5, %5 : vector<8x128xf32>
    %7 = arith.addf %0, %6 : vector<8x128xf32>
    %c0_3 = arith.constant 0 : index
    %c1 = arith.constant 1 : index
    %8 = vector.load %arg1[%c0_3, %c1] : memref<8x3xf32, #tpu.memory_space<vmem>>, vector<8x1xf32>
    %c1_4 = arith.constant 1 : index
    %c0_5 = arith.constant 0 : index
    %9 = vector.load %arg2[%c1_4, %c0_5] : memref<3x128xf32, #tpu.memory_space<vmem>>, vector<1x128xf32>
    %10 = vector.broadcast %8 : vector<8x1xf32> to vector<8x128xf32>
    %11 = vector.broadcast %9 : vector<1x128xf32> to vector<8x128xf32>
    %12 = arith.subf %10, %11 : vector<8x128xf32>
    %13 = arith.mulf %12, %12 : vector<8x128xf32>
    %14 = arith.addf %7, %13 : vector<8x128xf32>
    %c0_6 = arith.constant 0 : index
    %c2 = arith.constant 2 : index
    %15 = vector.load %arg1[%c0_6, %c2] : memref<8x3xf32, #tpu.memory_space<vmem>>, vector<8x1xf32>
    %c2_7 = arith.constant 2 : index
    %c0_8 = arith.constant 0 : index
    %16 = vector.load %arg2[%c2_7, %c0_8] : memref<3x128xf32, #tpu.memory_space<vmem>>, vector<1x128xf32>
    %17 = vector.broadcast %15 : vector<8x1xf32> to vector<8x128xf32>
    %18 = vector.broadcast %16 : vector<1x128xf32> to vector<8x128xf32>
    %19 = arith.subf %17, %18 : vector<8x128xf32>
    %20 = arith.mulf %19, %19 : vector<8x128xf32>
    %21 = arith.addf %14, %20 : vector<8x128xf32>
    %cst_9 = arith.constant -5.000000e-01 : f32
    %22 = vector.broadcast %cst_9 : f32 to vector<8x128xf32>
    %23 = arith.mulf %22, %21 : vector<8x128xf32>
    %24 = math.exp %23 : vector<8x128xf32>
    %c0_10 = arith.constant 0 : index
    %c0_11 = arith.constant 0 : index
    %25 = vector.load %arg3[%c0_10, %c0_11] : memref<8x128xf32, #tpu.memory_space<vmem>>, vector<8x128xf32>
    tpu.vector_store %arg3[%c0_10, %c0_11], %24 {strides = array<i32>} : memref<8x128xf32, #tpu.memory_space<vmem>>, vector<8x128xf32>,
    return
  }
  func.func @transform_0(%arg0: i32) -> (i32, i32) {
    %c0_i32 = arith.constant 0 : i32
    %c0_i32_0 = arith.constant 0 : i32
    %c0_i32_1 = arith.constant 0 : i32
    return %c0_i32, %c0_i32_0 : i32, i32
  }
  func.func @transform_1(%arg0: i32) -> (i32, i32) {
    %c0_i32 = arith.constant 0 : i32
    %c0_i32_0 = arith.constant 0 : i32
    return %c0_i32, %arg0 : i32, i32
  }
  func.func @transform_2(%arg0: i32) -> (i32, i32) {
    %c0_i32 = arith.constant 0 : i32
    %c0_i32_0 = arith.constant 0 : i32
    return %c0_i32, %arg0 : i32, i32
  }
}

module attributes {stable_mosaic.version = 11 : i64} {
  func.func @_mean_body(%arg0: i32, %arg1: memref<4x128xf32, #tpu.memory_space<vmem>>, %arg2: memref<4x128xf32, #tpu.memory_space<vmem>>, %arg3: memref<1x128xf32, #tpu.memory_space<vmem>>) attributes {dimension_semantics = [#tpu.dimension_semantics<parallel>], iteration_bounds = array<i64: 1>, scalar_prefetch = 0 : i64, scratch_operands = 0 : i64, tpu.core_type = #tpu.core_type<tc>, window_params = [{transform_indices = @transform_0, window_bounds = array<i64: 4, 128>}, {transform_indices = @transform_1, window_bounds = array<i64: 4, 128>}, {transform_indices = @transform_2, window_bounds = array<i64: 1, 128>}]} {
    %c0 = arith.constant 0 : index
    %c0_0 = arith.constant 0 : index
    %0 = vector.load %arg1[%c0, %c0_0] : memref<4x128xf32, #tpu.memory_space<vmem>>, vector<4x128xf32>
    %c0_1 = arith.constant 0 : index
    %c0_2 = arith.constant 0 : index
    %1 = vector.load %arg2[%c0_1, %c0_2] : memref<4x128xf32, #tpu.memory_space<vmem>>, vector<4x128xf32>
    %2 = arith.mulf %0, %1 : vector<4x128xf32>
    %cst = arith.constant dense<0.000000e+00> : vector<128xf32>
    %3 = vector.multi_reduction <add>, %2, %cst [0] : vector<4x128xf32> to vector<128xf32>
    %4 = vector.shape_cast %3 : vector<128xf32> to vector<1x128xf32>
    %c0_3 = arith.constant 0 : index
    %c0_4 = arith.constant 0 : index
    %5 = vector.load %arg3[%c0_3, %c0_4] : memref<1x128xf32, #tpu.memory_space<vmem>>, vector<1x128xf32>
    tpu.vector_store %arg3[%c0_3, %c0_4], %4 {strides = array<i32>} : memref<1x128xf32, #tpu.memory_space<vmem>>, vector<1x128xf32>,
    return
  }
  func.func @transform_0(%arg0: i32) -> (i32, i32) {
    %c0_i32 = arith.constant 0 : i32
    %c0_i32_0 = arith.constant 0 : i32
    return %c0_i32, %arg0 : i32, i32
  }
  func.func @transform_1(%arg0: i32) -> (i32, i32) {
    %c0_i32 = arith.constant 0 : i32
    %c0_i32_0 = arith.constant 0 : i32
    return %c0_i32, %arg0 : i32, i32
  }
  func.func @transform_2(%arg0: i32) -> (i32, i32) {
    %c0_i32 = arith.constant 0 : i32
    %c0_i32_0 = arith.constant 0 : i32
    return %c0_i32, %arg0 : i32, i32
  }
}

module attributes {stable_mosaic.version = 11 : i64} {
  func.func @_covar_body(%arg0: i32, %arg1: i32, %arg2: memref<128x2xf32, #tpu.memory_space<vmem>>, %arg3: memref<2x128xf32, #tpu.memory_space<vmem>>, %arg4: memref<128x3xf32, #tpu.memory_space<vmem>>, %arg5: memref<3x128xf32, #tpu.memory_space<vmem>>, %arg6: memref<32x128xf32, #tpu.memory_space<vmem>>, %arg7: memref<32x128xf32, #tpu.memory_space<vmem>>, %arg8: memref<128x128xf32, #tpu.memory_space<vmem>>) attributes {dimension_semantics = [#tpu.dimension_semantics<parallel>, #tpu.dimension_semantics<parallel>], iteration_bounds = array<i64: 1, 1>, scalar_prefetch = 0 : i64, scratch_operands = 0 : i64, tpu.core_type = #tpu.core_type<tc>, window_params = [{transform_indices = @transform_0, window_bounds = array<i64: 128, 2>}, {transform_indices = @transform_1, window_bounds = array<i64: 2, 128>}, {transform_indices = @transform_2, window_bounds = array<i64: 128, 3>}, {transform_indices = @transform_3, window_bounds = array<i64: 3, 128>}, {transform_indices = @transform_4, window_bounds = array<i64: 32, 128>}, {transform_indices = @transform_5, window_bounds = array<i64: 32, 128>}, {transform_indices = @transform_6, window_bounds = array<i64: 128, 128>}]} {
    %cst = arith.constant 0.000000e+00 : f32
    %0 = vector.broadcast %cst : f32 to vector<128x128xf32>
    %c0 = arith.constant 0 : index
    %c0_0 = arith.constant 0 : index
    %1 = vector.load %arg2[%c0, %c0_0] : memref<128x2xf32, #tpu.memory_space<vmem>>, vector<128x1xf32>
    %c0_1 = arith.constant 0 : index
    %c0_2 = arith.constant 0 : index
    %2 = vector.load %arg3[%c0_1, %c0_2] : memref<2x128xf32, #tpu.memory_space<vmem>>, vector<1x128xf32>
    %3 = vector.broadcast %1 : vector<128x1xf32> to vector<128x128xf32>
    %4 = vector.broadcast %2 : vector<1x128xf32> to vector<128x128xf32>
    %5 = arith.subf %3, %4 : vector<128x128xf32>
    %6 = arith.mulf %5, %5 : vector<128x128xf32>
    %7 = arith.addf %0, %6 : vector<128x128xf32>
    %c0_3 = arith.constant 0 : index
    %c1 = arith.constant 1 : index
    %8 = vector.load %arg2[%c0_3, %c1] : memref<128x2xf32, #tpu.memory_space<vmem>>, vector<128x1xf32>
    %c1_4 = arith.constant 1 : index
    %c0_5 = arith.constant 0 : index
    %9 = vector.load %arg3[%c1_4, %c0_5] : memref<2x128xf32, #tpu.memory_space<vmem>>, vector<1x128xf32>
    %10 = vector.broadcast %8 : vector<128x1xf32> to vector<128x128xf32>
    %11 = vector.broadcast %9 : vector<1x128xf32> to vector<128x128xf32>
    %12 = arith.subf %10, %11 : vector<128x128xf32>
    %13 = arith.mulf %12, %12 : vector<128x128xf32>
    %14 = arith.addf %7, %13 : vector<128x128xf32>
    %c0_6 = arith.constant 0 : index
    %c0_7 = arith.constant 0 : index
    %15 = vector.load %arg4[%c0_6, %c0_7] : memref<128x3xf32, #tpu.memory_space<vmem>>, vector<128x1xf32>
    %c0_8 = arith.constant 0 : index
    %c0_9 = arith.constant 0 : index
    %16 = vector.load %arg5[%c0_8, %c0_9] : memref<3x128xf32, #tpu.memory_space<vmem>>, vector<1x128xf32>
    %17 = vector.broadcast %15 : vector<128x1xf32> to vector<128x128xf32>
    %18 = vector.broadcast %16 : vector<1x128xf32> to vector<128x128xf32>
    %19 = arith.subf %17, %18 : vector<128x128xf32>
    %20 = arith.mulf %19, %19 : vector<128x128xf32>
    %21 = arith.addf %14, %20 : vector<128x128xf32>
    %c0_10 = arith.constant 0 : index
    %c1_11 = arith.constant 1 : index
    %22 = vector.load %arg4[%c0_10, %c1_11] : memref<128x3xf32, #tpu.memory_space<vmem>>, vector<128x1xf32>
    %c1_12 = arith.constant 1 : index
    %c0_13 = arith.constant 0 : index
    %23 = vector.load %arg5[%c1_12, %c0_13] : memref<3x128xf32, #tpu.memory_space<vmem>>, vector<1x128xf32>
    %24 = vector.broadcast %22 : vector<128x1xf32> to vector<128x128xf32>
    %25 = vector.broadcast %23 : vector<1x128xf32> to vector<128x128xf32>
    %26 = arith.subf %24, %25 : vector<128x128xf32>
    %27 = arith.mulf %26, %26 : vector<128x128xf32>
    %28 = arith.addf %21, %27 : vector<128x128xf32>
    %c0_14 = arith.constant 0 : index
    %c2 = arith.constant 2 : index
    %29 = vector.load %arg4[%c0_14, %c2] : memref<128x3xf32, #tpu.memory_space<vmem>>, vector<128x1xf32>
    %c2_15 = arith.constant 2 : index
    %c0_16 = arith.constant 0 : index
    %30 = vector.load %arg5[%c2_15, %c0_16] : memref<3x128xf32, #tpu.memory_space<vmem>>, vector<1x128xf32>
    %31 = vector.broadcast %29 : vector<128x1xf32> to vector<128x128xf32>
    %32 = vector.broadcast %30 : vector<1x128xf32> to vector<128x128xf32>
    %33 = arith.subf %31, %32 : vector<128x128xf32>
    %34 = arith.mulf %33, %33 : vector<128x128xf32>
    %35 = arith.addf %28, %34 : vector<128x128xf32>
    %cst_17 = arith.constant -5.000000e-01 : f32
    %36 = vector.broadcast %cst_17 : f32 to vector<128x128xf32>
    %37 = arith.mulf %36, %35 : vector<128x128xf32>
    %38 = math.exp %37 : vector<128x128xf32>
    %c0_18 = arith.constant 0 : index
    %c0_19 = arith.constant 0 : index
    %39 = vector.load %arg6[%c0_18, %c0_19] : memref<32x128xf32, #tpu.memory_space<vmem>>, vector<32x128xf32>
    %c0_20 = arith.constant 0 : index
    %c0_21 = arith.constant 0 : index
    %40 = vector.load %arg7[%c0_20, %c0_21] : memref<32x128xf32, #tpu.memory_space<vmem>>, vector<32x128xf32>
    %cst_22 = arith.constant dense<0.000000e+00> : vector<128x128xf32>
    %41 = tpu.matmul %39, %40, %cst_22 {dimension_numbers = #tpu.dot_dimension_numbers<[0], [0], [1], [1], [0, 1, 1, 1], [], []>} : vector<32x128xf32>, vector<32x128xf32>, vector<128x128xf32> -> vector<128x128xf32>
    %42 = arith.addf %38, %41 : vector<128x128xf32>
    %c0_23 = arith.constant 0 : index
    %c0_24 = arith.constant 0 : index
    %43 = vector.load %arg8[%c0_23, %c0_24] : memref<128x128xf32, #tpu.memory_space<vmem>>, vector<128x128xf32>
    tpu.vector_store %arg8[%c0_23, %c0_24], %42 {strides = array<i32>} : memref<128x128xf32, #tpu.memory_space<vmem>>, vector<128x128xf32>,
    return
  }
  func.func @transform_0(%arg0: i32, %arg1: i32) -> (i32, i32) {
    %c0_i32 = arith.constant 0 : i32
    %c0_i32_0 = arith.constant 0 : i32
    return %arg0, %c0_i32 : i32, i32
  }
  func.func @transform_1(%arg0: i32, %arg1: i32) -> (i32, i32) {
    %c0_i32 = arith.constant 0 : i32
    %c0_i32_0 = arith.constant 0 : i32
    return %c0_i32, %arg1 : i32, i32
  }
  func.func @transform_2(%arg0: i32, %arg1: i32) -> (i32, i32) {
    %c0_i32 = arith.constant 0 : i32
    %c0_i32_0 = arith.constant 0 : i32
    return %arg0, %c0_i32 : i32, i32
  }
  func.func @transform_3(%arg0: i32, %arg1: i32) -> (i32, i32) {
    %c0_i32 = arith.constant 0 : i32
    %c0_i32_0 = arith.constant 0 : i32
    return %c0_i32, %arg1 : i32, i32
  }
  func.func @transform_4(%arg0: i32, %arg1: i32) -> (i32, i32) {
    %c0_i32 = arith.constant 0 : i32
    %c0_i32_0 = arith.constant 0 : i32
    return %c0_i32, %arg0 : i32, i32
  }
  func.func @transform_5(%arg0: i32, %arg1: i32) -> (i32, i32) {
    %c0_i32 = arith.constant 0 : i32
    %c0_i32_0 = arith.constant 0 : i32
    return %c0_i32, %arg1 : i32, i32
  }
  func.func @transform_6(%arg0: i32, %arg1: i32) -> (i32, i32) {
    %c0_i32 = arith.constant 0 : i32
    return %arg0, %arg1 : i32, i32
  }
}

</mosaic_0001>

<llo_original>
// kernel: custom-call.8
$region0: #{custom-call.8}
  %s0 = inlined_call_operand.vmem [shape: f32[4,4], index: 0, kind: input, shape index: {}]
  %s1 = inlined_call_operand.vmem [shape: f32[4,4], index: 1, kind: output, shape index: {}]
  $region1: #{custom-call.8} parent=0
    #allocation0 [shape = 'u8[4096]{0}', space=vmem, size = 0x1000, scoped, tag = 'operand span for operand 0']
    #allocation1 [shape = 'u8[2048]{0}', space=vmem, size = 0x800, scoped, tag = 'packed  for operand 0']
    #allocation2 [shape = 'u8[4096]{0}', space=vmem, size = 0x1000, scoped, tag = 'operand span for operand 1']
    #allocation3 [shape = 'u8[2048]{0}', space=vmem, size = 0x800, scoped, tag = 'packed  for operand 1']
    // Predicated region
    $region2: #{custom-call.8} parent=1 // pred_check
      _
    $region3: #{custom-call.8} parent=1 // pred_check_branch
      %3 = sbr.rel (0) target = $region5
    $region4: #{custom-call.8} parent=1 // pred_region
      // Predicated region
      $region6: #{custom-call.8} parent=4 // pred_check
        _
      $region7: #{custom-call.8} parent=4 // pred_check_branch
        %5 = sbr.rel target = $region9
      $region8: #{custom-call.8} parent=4 // pred_region
        // Predicated region
        $region21: #{custom-call.8} parent=8 // pred_check
          _
        $region22: #{custom-call.8} parent=8 // pred_check_branch
          %21 = sbr.rel (0) target = $region24
        $region23: #{custom-call.8} parent=8 // pred_region
          %s23 = ssub.s32 16, 1
          loop: start=0, step=1, limit=1
          $region25: #{custom-call.8} parent=23 // loop_pre_header
            _
          $region26: #{custom-call.8} parent=23 // loop_header
            %s25 = sphi 0, %s29
            %p26 = scmp.ge.s32.totalorder %s25, 1
            %s30 = sphi %s0, %s0
            %s31 = sphi [#allocation1], [#allocation1]
          $region27: #{custom-call.8} parent=23 // loop_header_branch
            %28 = sbr.rel (%p26) target = $region31
          $region28: #{custom-call.8} parent=23 // loop_body
            %v32 = vld [vmem:[%s30] sm:%s23]
            %33 = vst [vmem:[%s31] sm:%s23] %v32
          $region29: #{custom-call.8} parent=23 // loop_footer
            %s29 = sadd.s32 1, %s25
          $region30: #{custom-call.8} parent=23 // loop_footer_branch
            %24 = sbr.rel target = $region26
          $region31: #{custom-call.8} parent=23 // loop_exit
            _
        $region24: #{custom-call.8} parent=8 // pred_fallthru
          _
      $region9: #{custom-call.8} parent=4 // pred_fallthru
        _
      // Predicated region
      $region10: #{custom-call.8} parent=4 // pred_check
        _
      $region11: #{custom-call.8} parent=4 // pred_check_branch
        %7 = sbr.rel (0) target = $region13
      $region12: #{custom-call.8} parent=4 // pred_region
        %s9 = ssub.s32 16, 1
        loop: start=0, step=1, limit=1
        $region14: #{custom-call.8} parent=12 // loop_pre_header
          _
        $region15: #{custom-call.8} parent=12 // loop_header
          %s11 = sphi 0, %s15
          %p12 = scmp.ge.s32.totalorder %s11, 1
          %s16 = sphi %s0, %s0
          %s17 = sphi [#allocation1], [#allocation1]
        $region16: #{custom-call.8} parent=12 // loop_header_branch
          %14 = sbr.rel (%p12) target = $region20
        $region17: #{custom-call.8} parent=12 // loop_body
          %v18 = vld [vmem:[%s16] sm:%s9]
          %19 = vst [vmem:[%s17] sm:%s9] %v18
        $region18: #{custom-call.8} parent=12 // loop_footer
          %s15 = sadd.s32 1, %s11
        $region19: #{custom-call.8} parent=12 // loop_footer_branch
          %10 = sbr.rel target = $region15
        $region20: #{custom-call.8} parent=12 // loop_exit
          _
      $region13: #{custom-call.8} parent=4 // pred_fallthru
        _
    $region5: #{custom-call.8} parent=1 // pred_fallthru
      _
    %34 = vnop
    %s36 = ssub.s32 16, 1
    %v37 = vld [vmem:[#allocation1] sm:%s36]
    %38 = vst [vmem:[#allocation0] sm:%s36] %v37
    %39 = vst [vmem:[#allocation2] sm:$0xff] 0.0
    %vm40 = vcmask 7168
    %v41 = vld [vmem:[#allocation2] ss:$0 sm:$0xff]
    %v42 = vld [vmem:[#allocation0] ss:$0 sm:$0xff]
    %v43 = vmul.f32 %v41, %v41
    %44 = vadd.xlane.f32.xlu0 %v43
    %v45 = vpop.xlane.xlu0 %44
    %v46 = vsub.f32 %v42, %v45
    %v47 = vrsqrt.pop %v46
    %v48 = vmul.f32 %v47, %v46
    %v49 = vmul.f32 %v48, %v47
    %v50 = vmul.f32 0.5, %v49
    %v51 = vsub.f32 1.5, %v50
    %v52 = vmul.f32 %v47, %v51
    %vm53 = vweird.f32 %v46
    %vm54 = vweird.f32 %v47
    %vm55 = vmor %vm53, %vm54
    %v56 = vsel %vm55, %v47, %v52
    %v57 = vld [vmem:[#allocation0] sm:$0xff]
    %v58 = vld [vmem:[#allocation2] sm:$0xff]
    %v59 = vmul.f32 %v58, %v41
    %60 = vadd.xlane.f32.xlu0 %v59
    %v61 = vpop.xlane.xlu0 %60
    %v62 = vsub.f32 %v57, %v61
    %v63 = vmul.f32 %v62, %v56
    %v64 = vsel %vm40, %v63, 0.0
    %v65 = vadd.f32 %v58, %v64
    %66 = vst [vmem:[#allocation2] sm:$0xff] %v65
    %vm67 = vcmask 15368
    %s68 = scalar_lea.vmem [#allocation2], 1
    %v69 = vld [vmem:[%s68] ss:$0 sm:$0xff]
    %s70 = scalar_lea.vmem [#allocation0], 1
    %v71 = vld [vmem:[%s70] ss:$0 sm:$0xff]
    %v72 = vmul.f32 %v69, %v69
    %73 = vadd.xlane.f32.xlu0 %v72
    %v74 = vpop.xlane.xlu0 %73
    %v75 = vsub.f32 %v71, %v74
    %v76 = vrsqrt.pop %v75
    %v77 = vmul.f32 %v76, %v75
    %v78 = vmul.f32 %v77, %v76
    %v79 = vmul.f32 0.5, %v78
    %v80 = vsub.f32 1.5, %v79
    %v81 = vmul.f32 %v76, %v80
    %vm82 = vweird.f32 %v75
    %vm83 = vweird.f32 %v76
    %vm84 = vmor %vm82, %vm83
    %v85 = vsel %vm84, %v76, %v81
    %v86 = vld [vmem:[#allocation0] sm:$0xff]
    %v87 = vld [vmem:[#allocation2] sm:$0xff]
    %v88 = vmul.f32 %v87, %v69
    %89 = vadd.xlane.f32.xlu0 %v88
    %v90 = vpop.xlane.xlu0 %89
    %v91 = vsub.f32 %v86, %v90
    %v92 = vmul.f32 %v91, %v85
    %vm93 = vcmask 1047553
    %vm94 = vmand %vm67, %vm93
    %v95 = vsel %vm94, %v92, 0.0
    %v96 = vadd.f32 %v87, %v95
    %97 = vst [vmem:[#allocation2] sm:$0xff] %v96
    %vm98 = vcmask 23568
    %s99 = scalar_lea.vmem [#allocation2], 2
    %v100 = vld [vmem:[%s99] ss:$0 sm:$0xff]
    %s101 = scalar_lea.vmem [#allocation0], 2
    %v102 = vld [vmem:[%s101] ss:$0 sm:$0xff]
    %v103 = vmul.f32 %v100, %v100
    %104 = vadd.xlane.f32.xlu0 %v103
    %v105 = vpop.xlane.xlu0 %104
    %v106 = vsub.f32 %v102, %v105
    %v107 = vrsqrt.pop %v106
    %v108 = vmul.f32 %v107, %v106
    %v109 = vmul.f32 %v108, %v107
    %v110 = vmul.f32 0.5, %v109
    %v111 = vsub.f32 1.5, %v110
    %v112 = vmul.f32 %v107, %v111
    %vm113 = vweird.f32 %v106
    %vm114 = vweird.f32 %v107
    %vm115 = vmor %vm113, %vm114
    %v116 = vsel %vm115, %v107, %v112
    %v117 = vld [vmem:[#allocation0] sm:$0xff]
    %v118 = vld [vmem:[#allocation2] sm:$0xff]
    %v119 = vmul.f32 %v118, %v100
    %120 = vadd.xlane.f32.xlu0 %v119
    %v121 = vpop.xlane.xlu0 %120
    %v122 = vsub.f32 %v117, %v121
    %v123 = vmul.f32 %v122, %v116
    %vm124 = vcmask 1047554
    %vm125 = vmand %vm98, %vm124
    %v126 = vsel %vm125, %v123, 0.0
    %v127 = vadd.f32 %v118, %v126
    %128 = vst [vmem:[#allocation2] sm:$0xff] %v127
    %vm129 = vcmask 31768
    %s130 = scalar_lea.vmem [#allocation2], 3
    %v131 = vld [vmem:[%s130] ss:$0 sm:$0xff]
    %s132 = scalar_lea.vmem [#allocation0], 3
    %v133 = vld [vmem:[%s132] ss:$0 sm:$0xff]
    %v134 = vmul.f32 %v131, %v131
    %135 = vadd.xlane.f32.xlu0 %v134
    %v136 = vpop.xlane.xlu0 %135
    %v137 = vsub.f32 %v133, %v136
    %v138 = vrsqrt.pop %v137
    %v139 = vmul.f32 %v138, %v137
    %v140 = vmul.f32 %v139, %v138
    %v141 = vmul.f32 0.5, %v140
    %v142 = vsub.f32 1.5, %v141
    %v143 = vmul.f32 %v138, %v142
    %vm144 = vweird.f32 %v137
    %vm145 = vweird.f32 %v138
    %vm146 = vmor %vm144, %vm145
    %v147 = vsel %vm146, %v138, %v143
    %v148 = vld [vmem:[#allocation0] sm:$0xff]
    %v149 = vld [vmem:[#allocation2] sm:$0xff]
    %v150 = vmul.f32 %v149, %v131
    %151 = vadd.xlane.f32.xlu0 %v150
    %v152 = vpop.xlane.xlu0 %151
    %v153 = vsub.f32 %v148, %v152
    %v154 = vmul.f32 %v153, %v147
    %vm155 = vcmask 1047555
    %vm156 = vmand %vm129, %vm155
    %v157 = vsel %vm156, %v154, 0.0
    %v158 = vadd.f32 %v149, %v157
    %159 = vst [vmem:[#allocation2] sm:$0xff] %v158
    %s161 = ssub.s32 16, 1
    %v162 = vld [vmem:[#allocation2] sm:%s161]
    %s164 = ssub.s32 16, 1
    %165 = vst [vmem:[#allocation3] sm:%s164] %v162
    // Predicated region
    $region32: #{custom-call.8} parent=1 // pred_check
      _
    $region33: #{custom-call.8} parent=1 // pred_check_branch
      %167 = sbr.rel (0) target = $region35
    $region34: #{custom-call.8} parent=1 // pred_region
      // Predicated region
      $region36: #{custom-call.8} parent=34 // pred_check
        _
      $region37: #{custom-call.8} parent=34 // pred_check_branch
        %169 = sbr.rel target = $region39
      $region38: #{custom-call.8} parent=34 // pred_region
        // Predicated region
        $region51: #{custom-call.8} parent=38 // pred_check
          _
        $region52: #{custom-call.8} parent=38 // pred_check_branch
          %185 = sbr.rel (0) target = $region54
        $region53: #{custom-call.8} parent=38 // pred_region
          %s187 = ssub.s32 16, 1
          loop: start=0, step=1, limit=1
          $region55: #{custom-call.8} parent=53 // loop_pre_header
            _
          $region56: #{custom-call.8} parent=53 // loop_header
            %s189 = sphi 0, %s193
            %p190 = scmp.ge.s32.totalorder %s189, 1
            %s194 = sphi [#allocation3], [#allocation3]
            %s195 = sphi %s1, %s1
          $region57: #{custom-call.8} parent=53 // loop_header_branch
            %192 = sbr.rel (%p190) target = $region61
          $region58: #{custom-call.8} parent=53 // loop_body
            %v196 = vld [vmem:[%s194] sm:%s187]
            %197 = vst [vmem:[%s195] sm:%s187] %v196
          $region59: #{custom-call.8} parent=53 // loop_footer
            %s193 = sadd.s32 1, %s189
          $region60: #{custom-call.8} parent=53 // loop_footer_branch
            %188 = sbr.rel target = $region56
          $region61: #{custom-call.8} parent=53 // loop_exit
            _
        $region54: #{custom-call.8} parent=38 // pred_fallthru
          _
      $region39: #{custom-call.8} parent=34 // pred_fallthru
        _
      // Predicated region
      $region40: #{custom-call.8} parent=34 // pred_check
        _
      $region41: #{custom-call.8} parent=34 // pred_check_branch
        %171 = sbr.rel (0) target = $region43
      $region42: #{custom-call.8} parent=34 // pred_region
        %s173 = ssub.s32 16, 1
        loop: start=0, step=1, limit=1
        $region44: #{custom-call.8} parent=42 // loop_pre_header
          _
        $region45: #{custom-call.8} parent=42 // loop_header
          %s175 = sphi 0, %s179
          %p176 = scmp.ge.s32.totalorder %s175, 1
          %s180 = sphi [#allocation3], [#allocation3]
          %s181 = sphi %s1, %s1
        $region46: #{custom-call.8} parent=42 // loop_header_branch
          %178 = sbr.rel (%p176) target = $region50
        $region47: #{custom-call.8} parent=42 // loop_body
          %v182 = vld [vmem:[%s180] sm:%s173]
          %183 = vst [vmem:[%s181] sm:%s173] %v182
        $region48: #{custom-call.8} parent=42 // loop_footer
          %s179 = sadd.s32 1, %s175
        $region49: #{custom-call.8} parent=42 // loop_footer_branch
          %174 = sbr.rel target = $region45
        $region50: #{custom-call.8} parent=42 // loop_exit
          _
      $region43: #{custom-call.8} parent=34 // pred_fallthru
        _
    $region35: #{custom-call.8} parent=1 // pred_fallthru
      _
    %198 = vnop

// kernel: custom-call.9
$region0: #{custom-call.9}
  %s0 = inlined_call_operand.vmem [shape: f32[1,4,4], index: 0, kind: input, shape index: {}]
  %s1 = inlined_call_operand.vmem [shape: f32[1,4,4], index: 1, kind: output, shape index: {}]
  $region1: #{custom-call.9} parent=0
    #allocation0 [shape = 'u8[4096]{0}', space=vmem, size = 0x1000, scoped, tag = 'operand span for operand 0']
    #allocation1 [shape = 'u8[2048]{0}', space=vmem, size = 0x800, scoped, tag = 'packed  for operand 0']
    #allocation2 [shape = 'u8[4096]{0}', space=vmem, size = 0x1000, scoped, tag = 'operand span for operand 1']
    #allocation3 [shape = 'u8[2048]{0}', space=vmem, size = 0x800, scoped, tag = 'packed  for operand 1']
    #allocation4 [shape = 'f32[4,4]{1,0}', space=vmem, size = 0x1000, scoped, tag = 'rescaled input a']
    // Predicated region
    $region2: #{custom-call.9} parent=1 // pred_check
      _
    $region3: #{custom-call.9} parent=1 // pred_check_branch
      %3 = sbr.rel (0) target = $region5
    $region4: #{custom-call.9} parent=1 // pred_region
      // Predicated region
      $region6: #{custom-call.9} parent=4 // pred_check
        _
      $region7: #{custom-call.9} parent=4 // pred_check_branch
        %5 = sbr.rel target = $region9
      $region8: #{custom-call.9} parent=4 // pred_region
        // Predicated region
        $region21: #{custom-call.9} parent=8 // pred_check
          _
        $region22: #{custom-call.9} parent=8 // pred_check_branch
          %21 = sbr.rel (0) target = $region24
        $region23: #{custom-call.9} parent=8 // pred_region
          %s23 = ssub.s32 16, 1
          loop: start=0, step=1, limit=1
          $region25: #{custom-call.9} parent=23 // loop_pre_header
            _
          $region26: #{custom-call.9} parent=23 // loop_header
            %s25 = sphi 0, %s29
            %p26 = scmp.ge.s32.totalorder %s25, 1
            %s30 = sphi %s0, %s0
            %s31 = sphi [#allocation1], [#allocation1]
          $region27: #{custom-call.9} parent=23 // loop_header_branch
            %28 = sbr.rel (%p26) target = $region31
          $region28: #{custom-call.9} parent=23 // loop_body
            %v32 = vld [vmem:[%s30] sm:%s23]
            %33 = vst [vmem:[%s31] sm:%s23] %v32
          $region29: #{custom-call.9} parent=23 // loop_footer
            %s29 = sadd.s32 1, %s25
          $region30: #{custom-call.9} parent=23 // loop_footer_branch
            %24 = sbr.rel target = $region26
          $region31: #{custom-call.9} parent=23 // loop_exit
            _
        $region24: #{custom-call.9} parent=8 // pred_fallthru
          _
      $region9: #{custom-call.9} parent=4 // pred_fallthru
        _
      // Predicated region
      $region10: #{custom-call.9} parent=4 // pred_check
        _
      $region11: #{custom-call.9} parent=4 // pred_check_branch
        %7 = sbr.rel (0) target = $region13
      $region12: #{custom-call.9} parent=4 // pred_region
        %s9 = ssub.s32 16, 1
        loop: start=0, step=1, limit=1
        $region14: #{custom-call.9} parent=12 // loop_pre_header
          _
        $region15: #{custom-call.9} parent=12 // loop_header
          %s11 = sphi 0, %s15
          %p12 = scmp.ge.s32.totalorder %s11, 1
          %s16 = sphi %s0, %s0
          %s17 = sphi [#allocation1], [#allocation1]
        $region16: #{custom-call.9} parent=12 // loop_header_branch
          %14 = sbr.rel (%p12) target = $region20
        $region17: #{custom-call.9} parent=12 // loop_body
          %v18 = vld [vmem:[%s16] sm:%s9]
          %19 = vst [vmem:[%s17] sm:%s9] %v18
        $region18: #{custom-call.9} parent=12 // loop_footer
          %s15 = sadd.s32 1, %s11
        $region19: #{custom-call.9} parent=12 // loop_footer_branch
          %10 = sbr.rel target = $region15
        $region20: #{custom-call.9} parent=12 // loop_exit
          _
      $region13: #{custom-call.9} parent=4 // pred_fallthru
        _
    $region5: #{custom-call.9} parent=1 // pred_fallthru
      _
    %34 = vnop
    %s36 = ssub.s32 16, 1
    %v37 = vld [vmem:[#allocation1] sm:%s36]
    %38 = vst [vmem:[#allocation0] sm:%s36] %v37
    %v39 = vlaneseq
    %v40 = vand.u32 %v39, 127
    %vm41 = vcmp.lt.s32.totalorder %v40, 4
    %v42 = vlaneseq
    %v43 = vshrl.u32 %v42, 7
    %vm45 = vcmp.eq.s32.totalorder %v43, %v40
    %v46 = vld [vmem:[#allocation0] sm:$0xff]
    %v47 = vsel %vm45, %v46, 0.0
    %48 = vadd.xlane.f32.xlu0 %v47
    %v49 = vpop.xlane.xlu0 %48
    %vm50 = vcmp.ge.s32.totalorder %v43, %v40
    %vm51 = vmand %vm50, %vm41
    %v52 = vsel %vm51, %v46, 0.0
    %v53 = vrcp.pop %v49
    %v54 = vmul.f32 %v49, %v53
    %v55 = vsub.f32 1.0, %v54
    %v56 = vmul.f32 %v53, %v55
    %v57 = vadd.f32 %v53, %v56
    %vm58 = vweird.f32 %v49
    %vm59 = vweird.f32 %v53
    %vm60 = vmor %vm58, %vm59
    %v61 = vsel %vm60, %v53, %v57
    %v62 = vand.u32 2147483647, %v49
    %vm63 = vcmp.eq.f32.partialorder %v62, 8.507059e+37
    %v64 = vand.u32 %v49, 2147483648
    %v65 = vor.u32 1.1754944e-38, %v64
    %v66 = vsel %vm63, %v65, %v61
    %v67 = vmul.f32 %v52, %v66
    %68 = vst [vmem:[#allocation4] sm:$0xff] %v67
    %v69 = vlaneseq
    %v70 = vand.u32 %v69, 127
    %v71 = vlaneseq
    %v72 = vshrl.u32 %v71, 7
    %vm74 = vcmp.eq.s32.totalorder %v70, %v72
    %v75 = vlaneseq
    %v76 = vand.u32 %v75, 127
    %vm77 = vcmp.eq.s32.totalorder %v76, 0
    %v78 = vsel %vm77, 1.0, -1.0
    %v79 = vsel %vm74, %v78, 0.0
    %s80 = scalar_lea.vmem [#allocation4], 1
    %v81 = vld [vmem:[%s80] ss:$0 sm:$0xff]
    %v82 = vxor.u32 %v81, 2147483648
    %v83 = vlaneseq
    %v84 = vand.u32 %v83, 127
    %vm85 = vcmp.eq.s32.totalorder %v84, 1
    %v86 = vmul.f32 %v82, %v79
    %87 = vadd.xlane.f32.xlu0 %v86
    %v88 = vpop.xlane.xlu0 %87
    %v89 = vsel %vm85, %v88, %v79
    %s90 = scalar_lea.vmem [#allocation4], 2
    %v91 = vld [vmem:[%s90] ss:$0 sm:$0xff]
    %v92 = vxor.u32 %v91, 2147483648
    %v93 = vlaneseq
    %v94 = vand.u32 %v93, 127
    %vm95 = vcmp.eq.s32.totalorder %v94, 2
    %v96 = vmul.f32 %v92, %v89
    %97 = vadd.xlane.f32.xlu0 %v96
    %v98 = vpop.xlane.xlu0 %97
    %v99 = vsel %vm95, %v98, %v89
    %s100 = scalar_lea.vmem [#allocation4], 3
    %v101 = vld [vmem:[%s100] ss:$0 sm:$0xff]
    %v102 = vxor.u32 %v101, 2147483648
    %v103 = vlaneseq
    %v104 = vand.u32 %v103, 127
    %vm105 = vcmp.eq.s32.totalorder %v104, 3
    %v106 = vmul.f32 %v102, %v99
    %107 = vadd.xlane.f32.xlu0 %v106
    %v108 = vpop.xlane.xlu0 %107
    %v109 = vsel %vm105, %v108, %v99
    %v110 = vrcp.pop %v49
    %v111 = vmul.f32 %v49, %v110
    %v112 = vsub.f32 1.0, %v111
    %v113 = vmul.f32 %v110, %v112
    %v114 = vadd.f32 %v110, %v113
    %vm115 = vweird.f32 %v49
    %vm116 = vweird.f32 %v110
    %vm117 = vmor %vm115, %vm116
    %v118 = vsel %vm117, %v110, %v114
    %v119 = vand.u32 2147483647, %v49
    %vm120 = vcmp.eq.f32.partialorder %v119, 8.507059e+37
    %v121 = vand.u32 %v49, 2147483648
    %v122 = vor.u32 1.1754944e-38, %v121
    %v123 = vsel %vm120, %v122, %v118
    %v124 = vmul.f32 %v109, %v123
    %vm125 = vweird.f32 %v49
    %v126 = vsel %vm125, %v109, %v124
    %127 = vst [vmem:[#allocation2] sm:$0xff] %v126
    %s129 = ssub.s32 16, 1
    %v130 = vld [vmem:[#allocation2] sm:%s129]
    %s132 = ssub.s32 16, 1
    %133 = vst [vmem:[#allocation3] sm:%s132] %v130
    // Predicated region
    $region32: #{custom-call.9} parent=1 // pred_check
      _
    $region33: #{custom-call.9} parent=1 // pred_check_branch
      %135 = sbr.rel (0) target = $region35
    $region34: #{custom-call.9} parent=1 // pred_region
      // Predicated region
      $region36: #{custom-call.9} parent=34 // pred_check
        _
      $region37: #{custom-call.9} parent=34 // pred_check_branch
        %137 = sbr.rel target = $region39
      $region38: #{custom-call.9} parent=34 // pred_region
        // Predicated region
        $region51: #{custom-call.9} parent=38 // pred_check
          _
        $region52: #{custom-call.9} parent=38 // pred_check_branch
          %153 = sbr.rel (0) target = $region54
        $region53: #{custom-call.9} parent=38 // pred_region
          %s155 = ssub.s32 16, 1
          loop: start=0, step=1, limit=1
          $region55: #{custom-call.9} parent=53 // loop_pre_header
            _
          $region56: #{custom-call.9} parent=53 // loop_header
            %s157 = sphi 0, %s161
            %p158 = scmp.ge.s32.totalorder %s157, 1
            %s162 = sphi [#allocation3], [#allocation3]
            %s163 = sphi %s1, %s1
          $region57: #{custom-call.9} parent=53 // loop_header_branch
            %160 = sbr.rel (%p158) target = $region61
          $region58: #{custom-call.9} parent=53 // loop_body
            %v164 = vld [vmem:[%s162] sm:%s155]
            %165 = vst [vmem:[%s163] sm:%s155] %v164
          $region59: #{custom-call.9} parent=53 // loop_footer
            %s161 = sadd.s32 1, %s157
          $region60: #{custom-call.9} parent=53 // loop_footer_branch
            %156 = sbr.rel target = $region56
          $region61: #{custom-call.9} parent=53 // loop_exit
            _
        $region54: #{custom-call.9} parent=38 // pred_fallthru
          _
      $region39: #{custom-call.9} parent=34 // pred_fallthru
        _
      // Predicated region
      $region40: #{custom-call.9} parent=34 // pred_check
        _
      $region41: #{custom-call.9} parent=34 // pred_check_branch
        %139 = sbr.rel (0) target = $region43
      $region42: #{custom-call.9} parent=34 // pred_region
        %s141 = ssub.s32 16, 1
        loop: start=0, step=1, limit=1
        $region44: #{custom-call.9} parent=42 // loop_pre_header
          _
        $region45: #{custom-call.9} parent=42 // loop_header
          %s143 = sphi 0, %s147
          %p144 = scmp.ge.s32.totalorder %s143, 1
          %s148 = sphi [#allocation3], [#allocation3]
          %s149 = sphi %s1, %s1
        $region46: #{custom-call.9} parent=42 // loop_header_branch
          %146 = sbr.rel (%p144) target = $region50
        $region47: #{custom-call.9} parent=42 // loop_body
          %v150 = vld [vmem:[%s148] sm:%s141]
          %151 = vst [vmem:[%s149] sm:%s141] %v150
        $region48: #{custom-call.9} parent=42 // loop_footer
          %s147 = sadd.s32 1, %s143
        $region49: #{custom-call.9} parent=42 // loop_footer_branch
          %142 = sbr.rel target = $region45
        $region50: #{custom-call.9} parent=42 // loop_exit
          _
      $region43: #{custom-call.9} parent=34 // pred_fallthru
        _
    $region35: #{custom-call.9} parent=1 // pred_fallthru
      _
    %166 = vnop

// kernel: custom-call.10
$region0: #{custom-call.10}
  %s0 = inlined_call_operand.vmem [shape: f32[8,8], index: 0, kind: input, shape index: {}]
  %s1 = inlined_call_operand.vmem [shape: f32[8,8], index: 1, kind: output, shape index: {}]
  $region1: #{custom-call.10} parent=0
    #allocation0 [shape = 'u8[4096]{0}', space=vmem, size = 0x1000, scoped, tag = 'operand span for operand 0']
    #allocation1 [shape = 'u8[4096]{0}', space=vmem, size = 0x1000, scoped, tag = 'operand span for operand 1']
    // Predicated region
    $region2: #{custom-call.10} parent=1 // pred_check
      _
    $region3: #{custom-call.10} parent=1 // pred_check_branch
      %3 = sbr.rel (0) target = $region5
    $region4: #{custom-call.10} parent=1 // pred_region
      // Predicated region
      $region6: #{custom-call.10} parent=4 // pred_check
        _
      $region7: #{custom-call.10} parent=4 // pred_check_branch
        %5 = sbr.rel (0) target = $region9
      $region8: #{custom-call.10} parent=4 // pred_region
        // Predicated region
        $region21: #{custom-call.10} parent=8 // pred_check
          _
        $region22: #{custom-call.10} parent=8 // pred_check_branch
          %21 = sbr.rel (0) target = $region24
        $region23: #{custom-call.10} parent=8 // pred_region
          loop: start=0, step=1, limit=1
          $region25: #{custom-call.10} parent=23 // loop_pre_header
            _
          $region26: #{custom-call.10} parent=23 // loop_header
            %s23 = sphi 0, %s27
            %p24 = scmp.ge.s32.totalorder %s23, 1
            %s28 = sphi %s0, %s0
            %s29 = sphi [#allocation0], [#allocation0]
          $region27: #{custom-call.10} parent=23 // loop_header_branch
            %26 = sbr.rel (%p24) target = $region31
          $region28: #{custom-call.10} parent=23 // loop_body
            %v30 = vld [vmem:[%s28] sm:$0xff]
            %31 = vst [vmem:[%s29] sm:$0xff] %v30
          $region29: #{custom-call.10} parent=23 // loop_footer
            %s27 = sadd.s32 1, %s23
          $region30: #{custom-call.10} parent=23 // loop_footer_branch
            %22 = sbr.rel target = $region26
          $region31: #{custom-call.10} parent=23 // loop_exit
            _
        $region24: #{custom-call.10} parent=8 // pred_fallthru
          _
        // Predicated region
        $region32: #{custom-call.10} parent=8 // pred_check
          _
        $region33: #{custom-call.10} parent=8 // pred_check_branch
          %33 = sbr.rel target = $region35
        $region34: #{custom-call.10} parent=8 // pred_region
          _
        $region35: #{custom-call.10} parent=8 // pred_fallthru
          _
      $region9: #{custom-call.10} parent=4 // pred_fallthru
        _
      // Predicated region
      $region10: #{custom-call.10} parent=4 // pred_check
        _
      $region11: #{custom-call.10} parent=4 // pred_check_branch
        %7 = sbr.rel target = $region13
      $region12: #{custom-call.10} parent=4 // pred_region
        %s9 = ssub.s32 256, 1
        loop: start=0, step=1, limit=1
        $region14: #{custom-call.10} parent=12 // loop_pre_header
          _
        $region15: #{custom-call.10} parent=12 // loop_header
          %s11 = sphi 0, %s15
          %p12 = scmp.ge.s32.totalorder %s11, 1
          %s16 = sphi %s0, %s0
          %s17 = sphi [#allocation0], [#allocation0]
        $region16: #{custom-call.10} parent=12 // loop_header_branch
          %14 = sbr.rel (%p12) target = $region20
        $region17: #{custom-call.10} parent=12 // loop_body
          %v18 = vld [vmem:[%s16] sm:%s9]
          %19 = vst [vmem:[%s17] sm:%s9] %v18
        $region18: #{custom-call.10} parent=12 // loop_footer
          %s15 = sadd.s32 1, %s11
        $region19: #{custom-call.10} parent=12 // loop_footer_branch
          %10 = sbr.rel target = $region15
        $region20: #{custom-call.10} parent=12 // loop_exit
          _
      $region13: #{custom-call.10} parent=4 // pred_fallthru
        _
    $region5: #{custom-call.10} parent=1 // pred_fallthru
      _
    %34 = vnop
    %35 = vst [vmem:[#allocation1] sm:$0xff] 0.0
    %vm36 = vcmask 7168
    %v37 = vld [vmem:[#allocation1] ss:$0 sm:$0xff]
    %v38 = vld [vmem:[#allocation0] ss:$0 sm:$0xff]
    %v39 = vmul.f32 %v37, %v37
    %40 = vadd.xlane.f32.xlu0 %v39
    %v41 = vpop.xlane.xlu0 %40
    %v42 = vsub.f32 %v38, %v41
    %v43 = vrsqrt.pop %v42
    %v44 = vmul.f32 %v43, %v42
    %v45 = vmul.f32 %v44, %v43
    %v46 = vmul.f32 0.5, %v45
    %v47 = vsub.f32 1.5, %v46
    %v48 = vmul.f32 %v43, %v47
    %vm49 = vweird.f32 %v42
    %vm50 = vweird.f32 %v43
    %vm51 = vmor %vm49, %vm50
    %v52 = vsel %vm51, %v43, %v48
    %v53 = vld [vmem:[#allocation0] sm:$0xff]
    %v54 = vld [vmem:[#allocation1] sm:$0xff]
    %v55 = vmul.f32 %v54, %v37
    %56 = vadd.xlane.f32.xlu0 %v55
    %v57 = vpop.xlane.xlu0 %56
    %v58 = vsub.f32 %v53, %v57
    %v59 = vmul.f32 %v58, %v52
    %v60 = vsel %vm36, %v59, 0.0
    %v61 = vadd.f32 %v54, %v60
    %62 = vst [vmem:[#allocation1] sm:$0xff] %v61
    %vm63 = vcmask 15368
    %s64 = scalar_lea.vmem [#allocation1], 1
    %v65 = vld [vmem:[%s64] ss:$0 sm:$0xff]
    %s66 = scalar_lea.vmem [#allocation0], 1
    %v67 = vld [vmem:[%s66] ss:$0 sm:$0xff]
    %v68 = vmul.f32 %v65, %v65
    %69 = vadd.xlane.f32.xlu0 %v68
    %v70 = vpop.xlane.xlu0 %69
    %v71 = vsub.f32 %v67, %v70
    %v72 = vrsqrt.pop %v71
    %v73 = vmul.f32 %v72, %v71
    %v74 = vmul.f32 %v73, %v72
    %v75 = vmul.f32 0.5, %v74
    %v76 = vsub.f32 1.5, %v75
    %v77 = vmul.f32 %v72, %v76
    %vm78 = vweird.f32 %v71
    %vm79 = vweird.f32 %v72
    %vm80 = vmor %vm78, %vm79
    %v81 = vsel %vm80, %v72, %v77
    %v82 = vld [vmem:[#allocation0] sm:$0xff]
    %v83 = vld [vmem:[#allocation1] sm:$0xff]
    %v84 = vmul.f32 %v83, %v65
    %85 = vadd.xlane.f32.xlu0 %v84
    %v86 = vpop.xlane.xlu0 %85
    %v87 = vsub.f32 %v82, %v86
    %v88 = vmul.f32 %v87, %v81
    %vm89 = vcmask 1047553
    %vm90 = vmand %vm63, %vm89
    %v91 = vsel %vm90, %v88, 0.0
    %v92 = vadd.f32 %v83, %v91
    %93 = vst [vmem:[#allocation1] sm:$0xff] %v92
    %vm94 = vcmask 23568
    %s95 = scalar_lea.vmem [#allocation1], 2
    %v96 = vld [vmem:[%s95] ss:$0 sm:$0xff]
    %s97 = scalar_lea.vmem [#allocation0], 2
    %v98 = vld [vmem:[%s97] ss:$0 sm:$0xff]
    %v99 = vmul.f32 %v96, %v96
    %100 = vadd.xlane.f32.xlu0 %v99
    %v101 = vpop.xlane.xlu0 %100
    %v102 = vsub.f32 %v98, %v101
    %v103 = vrsqrt.pop %v102
    %v104 = vmul.f32 %v103, %v102
    %v105 = vmul.f32 %v104, %v103
    %v106 = vmul.f32 0.5, %v105
    %v107 = vsub.f32 1.5, %v106
    %v108 = vmul.f32 %v103, %v107
    %vm109 = vweird.f32 %v102
    %vm110 = vweird.f32 %v103
    %vm111 = vmor %vm109, %vm110
    %v112 = vsel %vm111, %v103, %v108
    %v113 = vld [vmem:[#allocation0] sm:$0xff]
    %v114 = vld [vmem:[#allocation1] sm:$0xff]
    %v115 = vmul.f32 %v114, %v96
    %116 = vadd.xlane.f32.xlu0 %v115
    %v117 = vpop.xlane.xlu0 %116
    %v118 = vsub.f32 %v113, %v117
    %v119 = vmul.f32 %v118, %v112
    %vm120 = vcmask 1047554
    %vm121 = vmand %vm94, %vm120
    %v122 = vsel %vm121, %v119, 0.0
    %v123 = vadd.f32 %v114, %v122
    %124 = vst [vmem:[#allocation1] sm:$0xff] %v123
    %vm125 = vcmask 31768
    %s126 = scalar_lea.vmem [#allocation1], 3
    %v127 = vld [vmem:[%s126] ss:$0 sm:$0xff]
    %s128 = scalar_lea.vmem [#allocation0], 3
    %v129 = vld [vmem:[%s128] ss:$0 sm:$0xff]
    %v130 = vmul.f32 %v127, %v127
    %131 = vadd.xlane.f32.xlu0 %v130
    %v132 = vpop.xlane.xlu0 %131
    %v133 = vsub.f32 %v129, %v132
    %v134 = vrsqrt.pop %v133
    %v135 = vmul.f32 %v134, %v133
    %v136 = vmul.f32 %v135, %v134
    %v137 = vmul.f32 0.5, %v136
    %v138 = vsub.f32 1.5, %v137
    %v139 = vmul.f32 %v134, %v138
    %vm140 = vweird.f32 %v133
    %vm141 = vweird.f32 %v134
    %vm142 = vmor %vm140, %vm141
    %v143 = vsel %vm142, %v134, %v139
    %v144 = vld [vmem:[#allocation0] sm:$0xff]
    %v145 = vld [vmem:[#allocation1] sm:$0xff]
    %v146 = vmul.f32 %v145, %v127
    %147 = vadd.xlane.f32.xlu0 %v146
    %v148 = vpop.xlane.xlu0 %147
    %v149 = vsub.f32 %v144, %v148
    %v150 = vmul.f32 %v149, %v143
    %vm151 = vcmask 1047555
    %vm152 = vmand %vm125, %vm151
    %v153 = vsel %vm152, %v150, 0.0
    %v154 = vadd.f32 %v145, %v153
    %155 = vst [vmem:[#allocation1] sm:$0xff] %v154
    %vm156 = vcmask 39968
    %s157 = scalar_lea.vmem [#allocation1], 4
    %v158 = vld [vmem:[%s157] ss:$0 sm:$0xff]
    %s159 = scalar_lea.vmem [#allocation0], 4
    %v160 = vld [vmem:[%s159] ss:$0 sm:$0xff]
    %v161 = vmul.f32 %v158, %v158
    %162 = vadd.xlane.f32.xlu0 %v161
    %v163 = vpop.xlane.xlu0 %162
    %v164 = vsub.f32 %v160, %v163
    %v165 = vrsqrt.pop %v164
    %v166 = vmul.f32 %v165, %v164
    %v167 = vmul.f32 %v166, %v165
    %v168 = vmul.f32 0.5, %v167
    %v169 = vsub.f32 1.5, %v168
    %v170 = vmul.f32 %v165, %v169
    %vm171 = vweird.f32 %v164
    %vm172 = vweird.f32 %v165
    %vm173 = vmor %vm171, %vm172
    %v174 = vsel %vm173, %v165, %v170
    %v175 = vld [vmem:[#allocation0] sm:$0xff]
    %v176 = vld [vmem:[#allocation1] sm:$0xff]
    %v177 = vmul.f32 %v176, %v158
    %178 = vadd.xlane.f32.xlu0 %v177
    %v179 = vpop.xlane.xlu0 %178
    %v180 = vsub.f32 %v175, %v179
    %v181 = vmul.f32 %v180, %v174
    %vm182 = vcmask 1047556
    %vm183 = vmand %vm156, %vm182
    %v184 = vsel %vm183, %v181, 0.0
    %v185 = vadd.f32 %v176, %v184
    %186 = vst [vmem:[#allocation1] sm:$0xff] %v185
    %vm187 = vcmask 48168
    %s188 = scalar_lea.vmem [#allocation1], 5
    %v189 = vld [vmem:[%s188] ss:$0 sm:$0xff]
    %s190 = scalar_lea.vmem [#allocation0], 5
    %v191 = vld [vmem:[%s190] ss:$0 sm:$0xff]
    %v192 = vmul.f32 %v189, %v189
    %193 = vadd.xlane.f32.xlu0 %v192
    %v194 = vpop.xlane.xlu0 %193
    %v195 = vsub.f32 %v191, %v194
    %v196 = vrsqrt.pop %v195
    %v197 = vmul.f32 %v196, %v195
    %v198 = vmul.f32 %v197, %v196
    %v199 = vmul.f32 0.5, %v198
    %v200 = vsub.f32 1.5, %v199
    %v201 = vmul.f32 %v196, %v200
    %vm202 = vweird.f32 %v195
    %vm203 = vweird.f32 %v196
    %vm204 = vmor %vm202, %vm203
    %v205 = vsel %vm204, %v196, %v201
    %v206 = vld [vmem:[#allocation0] sm:$0xff]
    %v207 = vld [vmem:[#allocation1] sm:$0xff]
    %v208 = vmul.f32 %v207, %v189
    %209 = vadd.xlane.f32.xlu0 %v208
    %v210 = vpop.xlane.xlu0 %209
    %v211 = vsub.f32 %v206, %v210
    %v212 = vmul.f32 %v211, %v205
    %vm213 = vcmask 1047557
    %vm214 = vmand %vm187, %vm213
    %v215 = vsel %vm214, %v212, 0.0
    %v216 = vadd.f32 %v207, %v215
    %217 = vst [vmem:[#allocation1] sm:$0xff] %v216
    %vm218 = vcmask 56368
    %s219 = scalar_lea.vmem [#allocation1], 6
    %v220 = vld [vmem:[%s219] ss:$0 sm:$0xff]
    %s221 = scalar_lea.vmem [#allocation0], 6
    %v222 = vld [vmem:[%s221] ss:$0 sm:$0xff]
    %v223 = vmul.f32 %v220, %v220
    %224 = vadd.xlane.f32.xlu0 %v223
    %v225 = vpop.xlane.xlu0 %224
    %v226 = vsub.f32 %v222, %v225
    %v227 = vrsqrt.pop %v226
    %v228 = vmul.f32 %v227, %v226
    %v229 = vmul.f32 %v228, %v227
    %v230 = vmul.f32 0.5, %v229
    %v231 = vsub.f32 1.5, %v230
    %v232 = vmul.f32 %v227, %v231
    %vm233 = vweird.f32 %v226
    %vm234 = vweird.f32 %v227
    %vm235 = vmor %vm233, %vm234
    %v236 = vsel %vm235, %v227, %v232
    %v237 = vld [vmem:[#allocation0] sm:$0xff]
    %v238 = vld [vmem:[#allocation1] sm:$0xff]
    %v239 = vmul.f32 %v238, %v220
    %240 = vadd.xlane.f32.xlu0 %v239
    %v241 = vpop.xlane.xlu0 %240
    %v242 = vsub.f32 %v237, %v241
    %v243 = vmul.f32 %v242, %v236
    %vm244 = vcmask 1047558
    %vm245 = vmand %vm218, %vm244
    %v246 = vsel %vm245, %v243, 0.0
    %v247 = vadd.f32 %v238, %v246
    %248 = vst [vmem:[#allocation1] sm:$0xff] %v247
    %vm249 = vcmask 64568
    %s250 = scalar_lea.vmem [#allocation1], 7
    %v251 = vld [vmem:[%s250] ss:$0 sm:$0xff]
    %s252 = scalar_lea.vmem [#allocation0], 7
    %v253 = vld [vmem:[%s252] ss:$0 sm:$0xff]
    %v254 = vmul.f32 %v251, %v251
    %255 = vadd.xlane.f32.xlu0 %v254
    %v256 = vpop.xlane.xlu0 %255
    %v257 = vsub.f32 %v253, %v256
    %v258 = vrsqrt.pop %v257
    %v259 = vmul.f32 %v258, %v257
    %v260 = vmul.f32 %v259, %v258
    %v261 = vmul.f32 0.5, %v260
    %v262 = vsub.f32 1.5, %v261
    %v263 = vmul.f32 %v258, %v262
    %vm264 = vweird.f32 %v257
    %vm265 = vweird.f32 %v258
    %vm266 = vmor %vm264, %vm265
    %v267 = vsel %vm266, %v258, %v263
    %v268 = vld [vmem:[#allocation0] sm:$0xff]
    %v269 = vld [vmem:[#allocation1] sm:$0xff]
    %v270 = vmul.f32 %v269, %v251
    %271 = vadd.xlane.f32.xlu0 %v270
    %v272 = vpop.xlane.xlu0 %271
    %v273 = vsub.f32 %v268, %v272
    %v274 = vmul.f32 %v273, %v267
    %vm275 = vcmask 1047559
    %vm276 = vmand %vm249, %vm275
    %v277 = vsel %vm276, %v274, 0.0
    %v278 = vadd.f32 %v269, %v277
    %279 = vst [vmem:[#allocation1] sm:$0xff] %v278
    // Predicated region
    $region36: #{custom-call.10} parent=1 // pred_check
      _
    $region37: #{custom-call.10} parent=1 // pred_check_branch
      %281 = sbr.rel (0) target = $region39
    $region38: #{custom-call.10} parent=1 // pred_region
      // Predicated region
      $region40: #{custom-call.10} parent=38 // pred_check
        _
      $region41: #{custom-call.10} parent=38 // pred_check_branch
        %283 = sbr.rel (0) target = $region43
      $region42: #{custom-call.10} parent=38 // pred_region
        // Predicated region
        $region55: #{custom-call.10} parent=42 // pred_check
          _
        $region56: #{custom-call.10} parent=42 // pred_check_branch
          %299 = sbr.rel (0) target = $region58
        $region57: #{custom-call.10} parent=42 // pred_region
          loop: start=0, step=1, limit=1
          $region59: #{custom-call.10} parent=57 // loop_pre_header
            _
          $region60: #{custom-call.10} parent=57 // loop_header
            %s301 = sphi 0, %s305
            %p302 = scmp.ge.s32.totalorder %s301, 1
            %s306 = sphi [#allocation1], [#allocation1]
            %s307 = sphi %s1, %s1
          $region61: #{custom-call.10} parent=57 // loop_header_branch
            %304 = sbr.rel (%p302) target = $region65
          $region62: #{custom-call.10} parent=57 // loop_body
            %v308 = vld [vmem:[%s306] sm:$0xff]
            %309 = vst [vmem:[%s307] sm:$0xff] %v308
          $region63: #{custom-call.10} parent=57 // loop_footer
            %s305 = sadd.s32 1, %s301
          $region64: #{custom-call.10} parent=57 // loop_footer_branch
            %300 = sbr.rel target = $region60
          $region65: #{custom-call.10} parent=57 // loop_exit
            _
        $region58: #{custom-call.10} parent=42 // pred_fallthru
          _
        // Predicated region
        $region66: #{custom-call.10} parent=42 // pred_check
          _
        $region67: #{custom-call.10} parent=42 // pred_check_branch
          %311 = sbr.rel target = $region69
        $region68: #{custom-call.10} parent=42 // pred_region
          _
        $region69: #{custom-call.10} parent=42 // pred_fallthru
          _
      $region43: #{custom-call.10} parent=38 // pred_fallthru
        _
      // Predicated region
      $region44: #{custom-call.10} parent=38 // pred_check
        _
      $region45: #{custom-call.10} parent=38 // pred_check_branch
        %285 = sbr.rel target = $region47
      $region46: #{custom-call.10} parent=38 // pred_region
        %s287 = ssub.s32 256, 1
        loop: start=0, step=1, limit=1
        $region48: #{custom-call.10} parent=46 // loop_pre_header
          _
        $region49: #{custom-call.10} parent=46 // loop_header
          %s289 = sphi 0, %s293
          %p290 = scmp.ge.s32.totalorder %s289, 1
          %s294 = sphi [#allocation1], [#allocation1]
          %s295 = sphi %s1, %s1
        $region50: #{custom-call.10} parent=46 // loop_header_branch
          %292 = sbr.rel (%p290) target = $region54
        $region51: #{custom-call.10} parent=46 // loop_body
          %v296 = vld [vmem:[%s294] sm:%s287]
          %297 = vst [vmem:[%s295] sm:%s287] %v296
        $region52: #{custom-call.10} parent=46 // loop_footer
          %s293 = sadd.s32 1, %s289
        $region53: #{custom-call.10} parent=46 // loop_footer_branch
          %288 = sbr.rel target = $region49
        $region54: #{custom-call.10} parent=46 // loop_exit
          _
      $region47: #{custom-call.10} parent=38 // pred_fallthru
        _
    $region39: #{custom-call.10} parent=1 // pred_fallthru
      _
    %312 = vnop

// kernel: custom-call.11
$region0: #{custom-call.11}
  %s0 = inlined_call_operand.vmem [shape: f32[1,8,8], index: 0, kind: input, shape index: {}]
  %s1 = inlined_call_operand.vmem [shape: f32[1,8,8], index: 1, kind: output, shape index: {}]
  $region1: #{custom-call.11} parent=0
    #allocation0 [shape = 'u8[4096]{0}', space=vmem, size = 0x1000, scoped, tag = 'operand span for operand 0']
    #allocation1 [shape = 'u8[4096]{0}', space=vmem, size = 0x1000, scoped, tag = 'operand span for operand 1']
    #allocation2 [shape = 'f32[8,8]{1,0}', space=vmem, size = 0x1000, scoped, tag = 'rescaled input a']
    // Predicated region
    $region2: #{custom-call.11} parent=1 // pred_check
      _
    $region3: #{custom-call.11} parent=1 // pred_check_branch
      %3 = sbr.rel (0) target = $region5
    $region4: #{custom-call.11} parent=1 // pred_region
      // Predicated region
      $region6: #{custom-call.11} parent=4 // pred_check
        _
      $region7: #{custom-call.11} parent=4 // pred_check_branch
        %5 = sbr.rel (0) target = $region9
      $region8: #{custom-call.11} parent=4 // pred_region
        // Predicated region
        $region21: #{custom-call.11} parent=8 // pred_check
          _
        $region22: #{custom-call.11} parent=8 // pred_check_branch
          %21 = sbr.rel (0) target = $region24
        $region23: #{custom-call.11} parent=8 // pred_region
          loop: start=0, step=1, limit=1
          $region25: #{custom-call.11} parent=23 // loop_pre_header
            _
          $region26: #{custom-call.11} parent=23 // loop_header
            %s23 = sphi 0, %s27
            %p24 = scmp.ge.s32.totalorder %s23, 1
            %s28 = sphi %s0, %s0
            %s29 = sphi [#allocation0], [#allocation0]
          $region27: #{custom-call.11} parent=23 // loop_header_branch
            %26 = sbr.rel (%p24) target = $region31
          $region28: #{custom-call.11} parent=23 // loop_body
            %v30 = vld [vmem:[%s28] sm:$0xff]
            %31 = vst [vmem:[%s29] sm:$0xff] %v30
          $region29: #{custom-call.11} parent=23 // loop_footer
            %s27 = sadd.s32 1, %s23
          $region30: #{custom-call.11} parent=23 // loop_footer_branch
            %22 = sbr.rel target = $region26
          $region31: #{custom-call.11} parent=23 // loop_exit
            _
        $region24: #{custom-call.11} parent=8 // pred_fallthru
          _
        // Predicated region
        $region32: #{custom-call.11} parent=8 // pred_check
          _
        $region33: #{custom-call.11} parent=8 // pred_check_branch
          %33 = sbr.rel target = $region35
        $region34: #{custom-call.11} parent=8 // pred_region
          _
        $region35: #{custom-call.11} parent=8 // pred_fallthru
          _
      $region9: #{custom-call.11} parent=4 // pred_fallthru
        _
      // Predicated region
      $region10: #{custom-call.11} parent=4 // pred_check
        _
      $region11: #{custom-call.11} parent=4 // pred_check_branch
        %7 = sbr.rel target = $region13
      $region12: #{custom-call.11} parent=4 // pred_region
        %s9 = ssub.s32 256, 1
        loop: start=0, step=1, limit=1
        $region14: #{custom-call.11} parent=12 // loop_pre_header
          _
        $region15: #{custom-call.11} parent=12 // loop_header
          %s11 = sphi 0, %s15
          %p12 = scmp.ge.s32.totalorder %s11, 1
          %s16 = sphi %s0, %s0
          %s17 = sphi [#allocation0], [#allocation0]
        $region16: #{custom-call.11} parent=12 // loop_header_branch
          %14 = sbr.rel (%p12) target = $region20
        $region17: #{custom-call.11} parent=12 // loop_body
          %v18 = vld [vmem:[%s16] sm:%s9]
          %19 = vst [vmem:[%s17] sm:%s9] %v18
        $region18: #{custom-call.11} parent=12 // loop_footer
          %s15 = sadd.s32 1, %s11
        $region19: #{custom-call.11} parent=12 // loop_footer_branch
          %10 = sbr.rel target = $region15
        $region20: #{custom-call.11} parent=12 // loop_exit
          _
      $region13: #{custom-call.11} parent=4 // pred_fallthru
        _
    $region5: #{custom-call.11} parent=1 // pred_fallthru
      _
    %34 = vnop
    %v35 = vlaneseq
    %v36 = vand.u32 %v35, 127
    %vm37 = vcmp.lt.s32.totalorder %v36, 8
    %v38 = vlaneseq
    %v39 = vshrl.u32 %v38, 7
    %vm41 = vcmp.eq.s32.totalorder %v39, %v36
    %v42 = vld [vmem:[#allocation0] sm:$0xff]
    %v43 = vsel %vm41, %v42, 0.0
    %44 = vadd.xlane.f32.xlu0 %v43
    %v45 = vpop.xlane.xlu0 %44
    %vm46 = vcmp.ge.s32.totalorder %v39, %v36
    %vm47 = vmand %vm46, %vm37
    %v48 = vsel %vm47, %v42, 0.0
    %v49 = vrcp.pop %v45
    %v50 = vmul.f32 %v45, %v49
    %v51 = vsub.f32 1.0, %v50
    %v52 = vmul.f32 %v49, %v51
    %v53 = vadd.f32 %v49, %v52
    %vm54 = vweird.f32 %v45
    %vm55 = vweird.f32 %v49
    %vm56 = vmor %vm54, %vm55
    %v57 = vsel %vm56, %v49, %v53
    %v58 = vand.u32 2147483647, %v45
    %vm59 = vcmp.eq.f32.partialorder %v58, 8.507059e+37
    %v60 = vand.u32 %v45, 2147483648
    %v61 = vor.u32 1.1754944e-38, %v60
    %v62 = vsel %vm59, %v61, %v57
    %v63 = vmul.f32 %v48, %v62
    %64 = vst [vmem:[#allocation2] sm:$0xff] %v63
    %v65 = vlaneseq
    %v66 = vand.u32 %v65, 127
    %v67 = vlaneseq
    %v68 = vshrl.u32 %v67, 7
    %vm70 = vcmp.eq.s32.totalorder %v66, %v68
    %v71 = vlaneseq
    %v72 = vand.u32 %v71, 127
    %vm73 = vcmp.eq.s32.totalorder %v72, 0
    %v74 = vsel %vm73, 1.0, -1.0
    %v75 = vsel %vm70, %v74, 0.0
    %s76 = scalar_lea.vmem [#allocation2], 1
    %v77 = vld [vmem:[%s76] ss:$0 sm:$0xff]
    %v78 = vxor.u32 %v77, 2147483648
    %v79 = vlaneseq
    %v80 = vand.u32 %v79, 127
    %vm81 = vcmp.eq.s32.totalorder %v80, 1
    %v82 = vmul.f32 %v78, %v75
    %83 = vadd.xlane.f32.xlu0 %v82
    %v84 = vpop.xlane.xlu0 %83
    %v85 = vsel %vm81, %v84, %v75
    %s86 = scalar_lea.vmem [#allocation2], 2
    %v87 = vld [vmem:[%s86] ss:$0 sm:$0xff]
    %v88 = vxor.u32 %v87, 2147483648
    %v89 = vlaneseq
    %v90 = vand.u32 %v89, 127
    %vm91 = vcmp.eq.s32.totalorder %v90, 2
    %v92 = vmul.f32 %v88, %v85
    %93 = vadd.xlane.f32.xlu0 %v92
    %v94 = vpop.xlane.xlu0 %93
    %v95 = vsel %vm91, %v94, %v85
    %s96 = scalar_lea.vmem [#allocation2], 3
    %v97 = vld [vmem:[%s96] ss:$0 sm:$0xff]
    %v98 = vxor.u32 %v97, 2147483648
    %v99 = vlaneseq
    %v100 = vand.u32 %v99, 127
    %vm101 = vcmp.eq.s32.totalorder %v100, 3
    %v102 = vmul.f32 %v98, %v95
    %103 = vadd.xlane.f32.xlu0 %v102
    %v104 = vpop.xlane.xlu0 %103
    %v105 = vsel %vm101, %v104, %v95
    %s106 = scalar_lea.vmem [#allocation2], 4
    %v107 = vld [vmem:[%s106] ss:$0 sm:$0xff]
    %v108 = vxor.u32 %v107, 2147483648
    %v109 = vlaneseq
    %v110 = vand.u32 %v109, 127
    %vm111 = vcmp.eq.s32.totalorder %v110, 4
    %v112 = vmul.f32 %v108, %v105
    %113 = vadd.xlane.f32.xlu0 %v112
    %v114 = vpop.xlane.xlu0 %113
    %v115 = vsel %vm111, %v114, %v105
    %s116 = scalar_lea.vmem [#allocation2], 5
    %v117 = vld [vmem:[%s116] ss:$0 sm:$0xff]
    %v118 = vxor.u32 %v117, 2147483648
    %v119 = vlaneseq
    %v120 = vand.u32 %v119, 127
    %vm121 = vcmp.eq.s32.totalorder %v120, 5
    %v122 = vmul.f32 %v118, %v115
    %123 = vadd.xlane.f32.xlu0 %v122
    %v124 = vpop.xlane.xlu0 %123
    %v125 = vsel %vm121, %v124, %v115
    %s126 = scalar_lea.vmem [#allocation2], 6
    %v127 = vld [vmem:[%s126] ss:$0 sm:$0xff]
    %v128 = vxor.u32 %v127, 2147483648
    %v129 = vlaneseq
    %v130 = vand.u32 %v129, 127
    %vm131 = vcmp.eq.s32.totalorder %v130, 6
    %v132 = vmul.f32 %v128, %v125
    %133 = vadd.xlane.f32.xlu0 %v132
    %v134 = vpop.xlane.xlu0 %133
    %v135 = vsel %vm131, %v134, %v125
    %s136 = scalar_lea.vmem [#allocation2], 7
    %v137 = vld [vmem:[%s136] ss:$0 sm:$0xff]
    %v138 = vxor.u32 %v137, 2147483648
    %v139 = vlaneseq
    %v140 = vand.u32 %v139, 127
    %vm141 = vcmp.eq.s32.totalorder %v140, 7
    %v142 = vmul.f32 %v138, %v135
    %143 = vadd.xlane.f32.xlu0 %v142
    %v144 = vpop.xlane.xlu0 %143
    %v145 = vsel %vm141, %v144, %v135
    %v146 = vrcp.pop %v45
    %v147 = vmul.f32 %v45, %v146
    %v148 = vsub.f32 1.0, %v147
    %v149 = vmul.f32 %v146, %v148
    %v150 = vadd.f32 %v146, %v149
    %vm151 = vweird.f32 %v45
    %vm152 = vweird.f32 %v146
    %vm153 = vmor %vm151, %vm152
    %v154 = vsel %vm153, %v146, %v150
    %v155 = vand.u32 2147483647, %v45
    %vm156 = vcmp.eq.f32.partialorder %v155, 8.507059e+37
    %v157 = vand.u32 %v45, 2147483648
    %v158 = vor.u32 1.1754944e-38, %v157
    %v159 = vsel %vm156, %v158, %v154
    %v160 = vmul.f32 %v145, %v159
    %vm161 = vweird.f32 %v45
    %v162 = vsel %vm161, %v145, %v160
    %163 = vst [vmem:[#allocation1] sm:$0xff] %v162
    // Predicated region
    $region36: #{custom-call.11} parent=1 // pred_check
      _
    $region37: #{custom-call.11} parent=1 // pred_check_branch
      %165 = sbr.rel (0) target = $region39
    $region38: #{custom-call.11} parent=1 // pred_region
      // Predicated region
      $region40: #{custom-call.11} parent=38 // pred_check
        _
      $region41: #{custom-call.11} parent=38 // pred_check_branch
        %167 = sbr.rel (0) target = $region43
      $region42: #{custom-call.11} parent=38 // pred_region
        // Predicated region
        $region55: #{custom-call.11} parent=42 // pred_check
          _
        $region56: #{custom-call.11} parent=42 // pred_check_branch
          %183 = sbr.rel (0) target = $region58
        $region57: #{custom-call.11} parent=42 // pred_region
          loop: start=0, step=1, limit=1
          $region59: #{custom-call.11} parent=57 // loop_pre_header
            _
          $region60: #{custom-call.11} parent=57 // loop_header
            %s185 = sphi 0, %s189
            %p186 = scmp.ge.s32.totalorder %s185, 1
            %s190 = sphi [#allocation1], [#allocation1]
            %s191 = sphi %s1, %s1
          $region61: #{custom-call.11} parent=57 // loop_header_branch
            %188 = sbr.rel (%p186) target = $region65
          $region62: #{custom-call.11} parent=57 // loop_body
            %v192 = vld [vmem:[%s190] sm:$0xff]
            %193 = vst [vmem:[%s191] sm:$0xff] %v192
          $region63: #{custom-call.11} parent=57 // loop_footer
            %s189 = sadd.s32 1, %s185
          $region64: #{custom-call.11} parent=57 // loop_footer_branch
            %184 = sbr.rel target = $region60
          $region65: #{custom-call.11} parent=57 // loop_exit
            _
        $region58: #{custom-call.11} parent=42 // pred_fallthru
          _
        // Predicated region
        $region66: #{custom-call.11} parent=42 // pred_check
          _
        $region67: #{custom-call.11} parent=42 // pred_check_branch
          %195 = sbr.rel target = $region69
        $region68: #{custom-call.11} parent=42 // pred_region
          _
        $region69: #{custom-call.11} parent=42 // pred_fallthru
          _
      $region43: #{custom-call.11} parent=38 // pred_fallthru
        _
      // Predicated region
      $region44: #{custom-call.11} parent=38 // pred_check
        _
      $region45: #{custom-call.11} parent=38 // pred_check_branch
        %169 = sbr.rel target = $region47
      $region46: #{custom-call.11} parent=38 // pred_region
        %s171 = ssub.s32 256, 1
        loop: start=0, step=1, limit=1
        $region48: #{custom-call.11} parent=46 // loop_pre_header
          _
        $region49: #{custom-call.11} parent=46 // loop_header
          %s173 = sphi 0, %s177
          %p174 = scmp.ge.s32.totalorder %s173, 1
          %s178 = sphi [#allocation1], [#allocation1]
          %s179 = sphi %s1, %s1
        $region50: #{custom-call.11} parent=46 // loop_header_branch
          %176 = sbr.rel (%p174) target = $region54
        $region51: #{custom-call.11} parent=46 // loop_body
          %v180 = vld [vmem:[%s178] sm:%s171]
          %181 = vst [vmem:[%s179] sm:%s171] %v180
        $region52: #{custom-call.11} parent=46 // loop_footer
          %s177 = sadd.s32 1, %s173
        $region53: #{custom-call.11} parent=46 // loop_footer_branch
          %172 = sbr.rel target = $region49
        $region54: #{custom-call.11} parent=46 // loop_exit
          _
      $region47: #{custom-call.11} parent=38 // pred_fallthru
        _
    $region39: #{custom-call.11} parent=1 // pred_fallthru
      _
    %196 = vnop

// kernel: kronecker_variational_strategy_forward.8
$region0: #{kronecker_variational_strategy_forward.8}
  #allocation0 [shape = 'u32[]', space=smem, size = 0x4, offset = 0x4, fixed_abs, tag = 'smem constant byte address 0x4 - core index']
  #allocation1 [shape = 'u32[72,128]{1,0:T(1,128)}', space=vmem, size = 0x9000, scoped, tag = 'internal scratch']
  %s0 = inlined_call_operand.vmem [shape: f32[4,2], index: 0, kind: input, shape index: {}]
  %s1 = inlined_call_operand.vmem [shape: f32[2,128], index: 1, kind: input, shape index: {}]
  %s2 = inlined_call_operand.vmem [shape: f32[4,128], index: 2, kind: output, shape index: {}]
  %s3 = sld [smem:[#allocation0]]
  $region18: #{kronecker_variational_strategy_forward.8} parent=0
    _
  %s5 = ssub.s32 1, %s3
  %s6 = scalar_select 0, %s5, %s3
  // Predicated region
  $region2: #{kronecker_variational_strategy_forward.8} parent=0 // pred_check
    _
  $region3: #{kronecker_variational_strategy_forward.8} parent=0 // pred_check_branch
    %8 = sbr.rel (0) target = $region5
  $region4: #{kronecker_variational_strategy_forward.8} parent=0 // pred_region
    _
  $region5: #{kronecker_variational_strategy_forward.8} parent=0 // pred_fallthru
    _
  // Predicated region
  $region6: #{kronecker_variational_strategy_forward.8} parent=0 // pred_check
    _
  $region7: #{kronecker_variational_strategy_forward.8} parent=0 // pred_check_branch
    %10 = sbr.rel (0) target = $region9
  $region8: #{kronecker_variational_strategy_forward.8} parent=0 // pred_region
    _
  $region9: #{kronecker_variational_strategy_forward.8} parent=0 // pred_fallthru
    _
  %v11 = vld [vmem:[%s0] sm:$0xf]
  %v12 = vld [vmem:[%s1] sm:$0x1]
  %14 = vset.pattern.permute.xlu0 0
  %15 = vperm.xlu0 %14, %v11
  %v16 = vpop.permute.xlu0 %15
  %v18 = vperm.slane %v12, 0
  %v19 = vsub.f32 %v16, %v18
  %v20 = vmul.f32 %v19, %v19
  %v21 = vadd.f32 %v20, 0.0
  %v22 = vld [vmem:[%s1 + $0x1] sm:$0x1]
  %23 = vset.pattern.permute.xlu0 1
  %24 = vperm.xlu0 %23, %v11
  %v25 = vpop.permute.xlu0 %24
  %v27 = vperm.slane %v22, 0
  %v28 = vsub.f32 %v25, %v27
  %v29 = vmul.f32 %v28, %v28
  %v30 = vadd.f32 %v21, %v29
  %v31 = vmul.f32 %v30, -0.5
  %v32 = vmul.f32 %v31, 1.442695
  %v33 = vpow.pop %v32
  %34 = vst [vmem:[%s2] sm:$0xf] %v33
  // Predicated region
  $region10: #{kronecker_variational_strategy_forward.8} parent=0 // pred_check
    _
  $region11: #{kronecker_variational_strategy_forward.8} parent=0 // pred_check_branch
    %36 = sbr.rel (0) target = $region13
  $region12: #{kronecker_variational_strategy_forward.8} parent=0 // pred_region
    _
  $region13: #{kronecker_variational_strategy_forward.8} parent=0 // pred_fallthru
    _
  // Predicated region
  $region14: #{kronecker_variational_strategy_forward.8} parent=0 // pred_check
    _
  $region15: #{kronecker_variational_strategy_forward.8} parent=0 // pred_check_branch
    %38 = sbr.rel (0) target = $region17
  $region16: #{kronecker_variational_strategy_forward.8} parent=0 // pred_region
    _
  $region17: #{kronecker_variational_strategy_forward.8} parent=0 // pred_fallthru
    _

// kernel: kronecker_variational_strategy_forward.9
$region0: #{kronecker_variational_strategy_forward.9}
  #allocation0 [shape = 'u32[]', space=smem, size = 0x4, offset = 0x4, fixed_abs, tag = 'smem constant byte address 0x4 - core index']
  #allocation1 [shape = 'u32[72,128]{1,0:T(1,128)}', space=vmem, size = 0x9000, scoped, tag = 'internal scratch']
  %s0 = inlined_call_operand.vmem [shape: f32[8,3], index: 0, kind: input, shape index: {}]
  %s1 = inlined_call_operand.vmem [shape: f32[3,128], index: 1, kind: input, shape index: {}]
  %s2 = inlined_call_operand.vmem [shape: f32[8,128], index: 2, kind: output, shape index: {}]
  %s3 = sld [smem:[#allocation0]]
  $region18: #{kronecker_variational_strategy_forward.9} parent=0
    _
  %s5 = ssub.s32 1, %s3
  %s6 = scalar_select 0, %s5, %s3
  // Predicated region
  $region2: #{kronecker_variational_strategy_forward.9} parent=0 // pred_check
    _
  $region3: #{kronecker_variational_strategy_forward.9} parent=0 // pred_check_branch
    %8 = sbr.rel (0) target = $region5
  $region4: #{kronecker_variational_strategy_forward.9} parent=0 // pred_region
    _
  $region5: #{kronecker_variational_strategy_forward.9} parent=0 // pred_fallthru
    _
  // Predicated region
  $region6: #{kronecker_variational_strategy_forward.9} parent=0 // pred_check
    _
  $region7: #{kronecker_variational_strategy_forward.9} parent=0 // pred_check_branch
    %10 = sbr.rel (0) target = $region9
  $region8: #{kronecker_variational_strategy_forward.9} parent=0 // pred_region
    _
  $region9: #{kronecker_variational_strategy_forward.9} parent=0 // pred_fallthru
    _
  %v11 = vld [vmem:[%s0] sm:$0xff]
  %v12 = vld [vmem:[%s1] sm:$0x1]
  %14 = vset.pattern.permute.xlu0 0
  %15 = vperm.xlu0 %14, %v11
  %v16 = vpop.permute.xlu0 %15
  %v18 = vperm.slane %v12, 0
  %v19 = vsub.f32 %v16, %v18
  %v20 = vmul.f32 %v19, %v19
  %v21 = vadd.f32 %v20, 0.0
  %v22 = vld [vmem:[%s1 + $0x1] sm:$0x1]
  %23 = vset.pattern.permute.xlu0 1
  %24 = vperm.xlu0 %23, %v11
  %v25 = vpop.permute.xlu0 %24
  %v27 = vperm.slane %v22, 0
  %v28 = vsub.f32 %v25, %v27
  %v29 = vmul.f32 %v28, %v28
  %v30 = vadd.f32 %v21, %v29
  %v31 = vld [vmem:[%s1 + $0x2] sm:$0x1]
  %32 = vset.pattern.permute.xlu0 2
  %33 = vperm.xlu0 %32, %v11
  %v34 = vpop.permute.xlu0 %33
  %v36 = vperm.slane %v31, 0
  %v37 = vsub.f32 %v34, %v36
  %v38 = vmul.f32 %v37, %v37
  %v39 = vadd.f32 %v30, %v38
  %v40 = vmul.f32 %v39, -0.5
  %v41 = vmul.f32 %v40, 1.442695
  %v42 = vpow.pop %v41
  %43 = vst [vmem:[%s2] sm:$0xff] %v42
  // Predicated region
  $region10: #{kronecker_variational_strategy_forward.9} parent=0 // pred_check
    _
  $region11: #{kronecker_variational_strategy_forward.9} parent=0 // pred_check_branch
    %45 = sbr.rel (0) target = $region13
  $region12: #{kronecker_variational_strategy_forward.9} parent=0 // pred_region
    _
  $region13: #{kronecker_variational_strategy_forward.9} parent=0 // pred_fallthru
    _
  // Predicated region
  $region14: #{kronecker_variational_strategy_forward.9} parent=0 // pred_check
    _
  $region15: #{kronecker_variational_strategy_forward.9} parent=0 // pred_check_branch
    %47 = sbr.rel (0) target = $region17
  $region16: #{kronecker_variational_strategy_forward.9} parent=0 // pred_region
    _
  $region17: #{kronecker_variational_strategy_forward.9} parent=0 // pred_fallthru
    _

// kernel: kronecker_variational_strategy_forward.10
$region0: #{kronecker_variational_strategy_forward.10}
  #allocation0 [shape = 'u32[]', space=smem, size = 0x4, offset = 0x4, fixed_abs, tag = 'smem constant byte address 0x4 - core index']
  #allocation1 [shape = 'u32[72,128]{1,0:T(1,128)}', space=vmem, size = 0x9000, scoped, tag = 'internal scratch']
  %s0 = inlined_call_operand.vmem [shape: f32[4,128], index: 0, kind: input, shape index: {}]
  %s1 = inlined_call_operand.vmem [shape: f32[4,128], index: 1, kind: input, shape index: {}]
  %s2 = inlined_call_operand.vmem [shape: f32[1,128], index: 2, kind: output, shape index: {}]
  %s3 = sld [smem:[#allocation0]]
  $region18: #{kronecker_variational_strategy_forward.10} parent=0
    _
  %s5 = ssub.s32 1, %s3
  %s6 = scalar_select 0, %s5, %s3
  // Predicated region
  $region2: #{kronecker_variational_strategy_forward.10} parent=0 // pred_check
    _
  $region3: #{kronecker_variational_strategy_forward.10} parent=0 // pred_check_branch
    %8 = sbr.rel (0) target = $region5
  $region4: #{kronecker_variational_strategy_forward.10} parent=0 // pred_region
    _
  $region5: #{kronecker_variational_strategy_forward.10} parent=0 // pred_fallthru
    _
  // Predicated region
  $region6: #{kronecker_variational_strategy_forward.10} parent=0 // pred_check
    _
  $region7: #{kronecker_variational_strategy_forward.10} parent=0 // pred_check_branch
    %10 = sbr.rel (0) target = $region9
  $region8: #{kronecker_variational_strategy_forward.10} parent=0 // pred_region
    _
  $region9: #{kronecker_variational_strategy_forward.10} parent=0 // pred_fallthru
    _
  %v11 = vld [vmem:[%s0] sm:$0xf]
  %v12 = vld [vmem:[%s1] sm:$0xf]
  %v13 = vmul.f32 %v11, %v12
  %vm14 = vcmask 1043456
  %v15 = vsel %vm14, %v13, 0.0
  %v16 = vrot.slane %v15, 4
  %v17 = vadd.f32 %v15, %v16
  %v18 = vrot.slane %v17, 2
  %v19 = vadd.f32 %v17, %v18
  %v20 = vrot.slane %v19, 1
  %v21 = vadd.f32 %v19, %v20
  %22 = vst [vmem:[%s2] sm:$0x1] %v21
  // Predicated region
  $region10: #{kronecker_variational_strategy_forward.10} parent=0 // pred_check
    _
  $region11: #{kronecker_variational_strategy_forward.10} parent=0 // pred_check_branch
    %24 = sbr.rel (0) target = $region13
  $region12: #{kronecker_variational_strategy_forward.10} parent=0 // pred_region
    _
  $region13: #{kronecker_variational_strategy_forward.10} parent=0 // pred_fallthru
    _
  // Predicated region
  $region14: #{kronecker_variational_strategy_forward.10} parent=0 // pred_check
    _
  $region15: #{kronecker_variational_strategy_forward.10} parent=0 // pred_check_branch
    %26 = sbr.rel (0) target = $region17
  $region16: #{kronecker_variational_strategy_forward.10} parent=0 // pred_region
    _
  $region17: #{kronecker_variational_strategy_forward.10} parent=0 // pred_fallthru
    _

// kernel: kronecker_variational_strategy_forward.11
$region0: #{kronecker_variational_strategy_forward.11}
  #allocation0 [shape = 'u32[]', space=smem, size = 0x4, offset = 0x4, fixed_abs, tag = 'smem constant byte address 0x4 - core index']
  #allocation1 [shape = 'u32[72,128]{1,0:T(1,128)}', space=vmem, size = 0x9000, scoped, tag = 'internal scratch']
  %s0 = inlined_call_operand.vmem [shape: f32[128,2], index: 0, kind: input, shape index: {}]
  %s1 = inlined_call_operand.vmem [shape: f32[2,128], index: 1, kind: input, shape index: {}]
  %s2 = inlined_call_operand.vmem [shape: f32[128,3], index: 2, kind: input, shape index: {}]
  %s3 = inlined_call_operand.vmem [shape: f32[3,128], index: 3, kind: input, shape index: {}]
  %s4 = inlined_call_operand.vmem [shape: f32[32,128], index: 4, kind: input, shape index: {}]
  %s5 = inlined_call_operand.vmem [shape: f32[32,128], index: 5, kind: input, shape index: {}]
  %s6 = inlined_call_operand.vmem [shape: f32[128,128], index: 6, kind: output, shape index: {}]
  %s7 = sld [smem:[#allocation0]]
  $region34: #{kronecker_variational_strategy_forward.11} parent=0
    _
  %s9 = ssub.s32 1, %s7
  %s10 = scalar_select 0, %s9, %s7
  // Predicated region
  $region2: #{kronecker_variational_strategy_forward.11} parent=0 // pred_check
    _
  $region3: #{kronecker_variational_strategy_forward.11} parent=0 // pred_check_branch
    %12 = sbr.rel (0) target = $region5
  $region4: #{kronecker_variational_strategy_forward.11} parent=0 // pred_region
    _
  $region5: #{kronecker_variational_strategy_forward.11} parent=0 // pred_fallthru
    _
  // Predicated region
  $region6: #{kronecker_variational_strategy_forward.11} parent=0 // pred_check
    _
  $region7: #{kronecker_variational_strategy_forward.11} parent=0 // pred_check_branch
    %14 = sbr.rel (0) target = $region9
  $region8: #{kronecker_variational_strategy_forward.11} parent=0 // pred_region
    _
  $region9: #{kronecker_variational_strategy_forward.11} parent=0 // pred_fallthru
    _
  // Predicated region
  $region10: #{kronecker_variational_strategy_forward.11} parent=0 // pred_check
    _
  $region11: #{kronecker_variational_strategy_forward.11} parent=0 // pred_check_branch
    %16 = sbr.rel (0) target = $region13
  $region12: #{kronecker_variational_strategy_forward.11} parent=0 // pred_region
    _
  $region13: #{kronecker_variational_strategy_forward.11} parent=0 // pred_fallthru
    _
  // Predicated region
  $region14: #{kronecker_variational_strategy_forward.11} parent=0 // pred_check
    _
  $region15: #{kronecker_variational_strategy_forward.11} parent=0 // pred_check_branch
    %18 = sbr.rel (0) target = $region17
  $region16: #{kronecker_variational_strategy_forward.11} parent=0 // pred_region
    _
  $region17: #{kronecker_variational_strategy_forward.11} parent=0 // pred_fallthru
    _
  // Predicated region
  $region18: #{kronecker_variational_strategy_forward.11} parent=0 // pred_check
    _
  $region19: #{kronecker_variational_strategy_forward.11} parent=0 // pred_check_branch
    %20 = sbr.rel (0) target = $region21
  $region20: #{kronecker_variational_strategy_forward.11} parent=0 // pred_region
    _
  $region21: #{kronecker_variational_strategy_forward.11} parent=0 // pred_fallthru
    _
  // Predicated region
  $region22: #{kronecker_variational_strategy_forward.11} parent=0 // pred_check
    _
  $region23: #{kronecker_variational_strategy_forward.11} parent=0 // pred_check_branch
    %22 = sbr.rel (0) target = $region25
  $region24: #{kronecker_variational_strategy_forward.11} parent=0 // pred_region
    _
  $region25: #{kronecker_variational_strategy_forward.11} parent=0 // pred_fallthru
    _
  %v23 = vld [vmem:[%s0] sm:$0xff]
  %v24 = vld [vmem:[%s0 + $0x8] sm:$0xff]
  %v25 = vld [vmem:[%s0 + $0x10] sm:$0xff]
  %v26 = vld [vmem:[%s0 + $0x18] sm:$0xff]
  %v27 = vld [vmem:[%s0 + $0x20] sm:$0xff]
  %v28 = vld [vmem:[%s0 + $0x28] sm:$0xff]
  %v29 = vld [vmem:[%s0 + $0x30] sm:$0xff]
  %v30 = vld [vmem:[%s0 + $0x38] sm:$0xff]
  %v31 = vld [vmem:[%s0 + $0x40] sm:$0xff]
  %v32 = vld [vmem:[%s0 + $0x48] sm:$0xff]
  %v33 = vld [vmem:[%s0 + $0x50] sm:$0xff]
  %v34 = vld [vmem:[%s0 + $0x58] sm:$0xff]
  %v35 = vld [vmem:[%s0 + $0x60] sm:$0xff]
  %v36 = vld [vmem:[%s0 + $0x68] sm:$0xff]
  %v37 = vld [vmem:[%s0 + $0x70] sm:$0xff]
  %v38 = vld [vmem:[%s0 + $0x78] sm:$0xff]
  %v39 = vld [vmem:[%s1] sm:$0x1]
  %41 = vset.pattern.permute.xlu0 0
  %42 = vperm.xlu0 %41, %v23
  %v43 = vpop.permute.xlu0 %42
  %46 = vset.pattern.permute.xlu0 0
  %47 = vperm.xlu0 %46, %v24
  %v48 = vpop.permute.xlu0 %47
  %51 = vset.pattern.permute.xlu0 0
  %52 = vperm.xlu0 %51, %v25
  %v53 = vpop.permute.xlu0 %52
  %56 = vset.pattern.permute.xlu0 0
  %57 = vperm.xlu0 %56, %v26
  %v58 = vpop.permute.xlu0 %57
  %61 = vset.pattern.permute.xlu0 0
  %62 = vperm.xlu0 %61, %v27
  %v63 = vpop.permute.xlu0 %62
  %66 = vset.pattern.permute.xlu0 0
  %67 = vperm.xlu0 %66, %v28
  %v68 = vpop.permute.xlu0 %67
  %71 = vset.pattern.permute.xlu0 0
  %72 = vperm.xlu0 %71, %v29
  %v73 = vpop.permute.xlu0 %72
  %76 = vset.pattern.permute.xlu0 0
  %77 = vperm.xlu0 %76, %v30
  %v78 = vpop.permute.xlu0 %77
  %81 = vset.pattern.permute.xlu0 0
  %82 = vperm.xlu0 %81, %v31
  %v83 = vpop.permute.xlu0 %82
  %86 = vset.pattern.permute.xlu0 0
  %87 = vperm.xlu0 %86, %v32
  %v88 = vpop.permute.xlu0 %87
  %91 = vset.pattern.permute.xlu0 0
  %92 = vperm.xlu0 %91, %v33
  %v93 = vpop.permute.xlu0 %92
  %96 = vset.pattern.permute.xlu0 0
  %97 = vperm.xlu0 %96, %v34
  %v98 = vpop.permute.xlu0 %97
  %101 = vset.pattern.permute.xlu0 0
  %102 = vperm.xlu0 %101, %v35
  %v103 = vpop.permute.xlu0 %102
  %106 = vset.pattern.permute.xlu0 0
  %107 = vperm.xlu0 %106, %v36
  %v108 = vpop.permute.xlu0 %107
  %111 = vset.pattern.permute.xlu0 0
  %112 = vperm.xlu0 %111, %v37
  %v113 = vpop.permute.xlu0 %112
  %116 = vset.pattern.permute.xlu0 0
  %117 = vperm.xlu0 %116, %v38
  %v118 = vpop.permute.xlu0 %117
  %v120 = vperm.slane %v39, 0
  %v121 = vsub.f32 %v43, %v120
  %v122 = vsub.f32 %v48, %v120
  %v123 = vsub.f32 %v53, %v120
  %v124 = vsub.f32 %v58, %v120
  %v125 = vsub.f32 %v63, %v120
  %v126 = vsub.f32 %v68, %v120
  %v127 = vsub.f32 %v73, %v120
  %v128 = vsub.f32 %v78, %v120
  %v129 = vsub.f32 %v83, %v120
  %v130 = vsub.f32 %v88, %v120
  %v131 = vsub.f32 %v93, %v120
  %v132 = vsub.f32 %v98, %v120
  %v133 = vsub.f32 %v103, %v120
  %v134 = vsub.f32 %v108, %v120
  %v135 = vsub.f32 %v113, %v120
  %v136 = vsub.f32 %v118, %v120
  %v137 = vmul.f32 %v121, %v121
  %v138 = vmul.f32 %v122, %v122
  %v139 = vmul.f32 %v123, %v123
  %v140 = vmul.f32 %v124, %v124
  %v141 = vmul.f32 %v125, %v125
  %v142 = vmul.f32 %v126, %v126
  %v143 = vmul.f32 %v127, %v127
  %v144 = vmul.f32 %v128, %v128
  %v145 = vmul.f32 %v129, %v129
  %v146 = vmul.f32 %v130, %v130
  %v147 = vmul.f32 %v131, %v131
  %v148 = vmul.f32 %v132, %v132
  %v149 = vmul.f32 %v133, %v133
  %v150 = vmul.f32 %v134, %v134
  %v151 = vmul.f32 %v135, %v135
  %v152 = vmul.f32 %v136, %v136
  %v153 = vadd.f32 %v137, 0.0
  %v154 = vadd.f32 %v138, 0.0
  %v155 = vadd.f32 %v139, 0.0
  %v156 = vadd.f32 %v140, 0.0
  %v157 = vadd.f32 %v141, 0.0
  %v158 = vadd.f32 %v142, 0.0
  %v159 = vadd.f32 %v143, 0.0
  %v160 = vadd.f32 %v144, 0.0
  %v161 = vadd.f32 %v145, 0.0
  %v162 = vadd.f32 %v146, 0.0
  %v163 = vadd.f32 %v147, 0.0
  %v164 = vadd.f32 %v148, 0.0
  %v165 = vadd.f32 %v149, 0.0
  %v166 = vadd.f32 %v150, 0.0
  %v167 = vadd.f32 %v151, 0.0
  %v168 = vadd.f32 %v152, 0.0
  %v169 = vld [vmem:[%s1 + $0x1] sm:$0x1]
  %170 = vset.pattern.permute.xlu0 1
  %171 = vperm.xlu0 %170, %v23
  %v172 = vpop.permute.xlu0 %171
  %174 = vset.pattern.permute.xlu0 1
  %175 = vperm.xlu0 %174, %v24
  %v176 = vpop.permute.xlu0 %175
  %178 = vset.pattern.permute.xlu0 1
  %179 = vperm.xlu0 %178, %v25
  %v180 = vpop.permute.xlu0 %179
  %182 = vset.pattern.permute.xlu0 1
  %183 = vperm.xlu0 %182, %v26
  %v184 = vpop.permute.xlu0 %183
  %186 = vset.pattern.permute.xlu0 1
  %187 = vperm.xlu0 %186, %v27
  %v188 = vpop.permute.xlu0 %187
  %190 = vset.pattern.permute.xlu0 1
  %191 = vperm.xlu0 %190, %v28
  %v192 = vpop.permute.xlu0 %191
  %194 = vset.pattern.permute.xlu0 1
  %195 = vperm.xlu0 %194, %v29
  %v196 = vpop.permute.xlu0 %195
  %198 = vset.pattern.permute.xlu0 1
  %199 = vperm.xlu0 %198, %v30
  %v200 = vpop.permute.xlu0 %199
  %202 = vset.pattern.permute.xlu0 1
  %203 = vperm.xlu0 %202, %v31
  %v204 = vpop.permute.xlu0 %203
  %206 = vset.pattern.permute.xlu0 1
  %207 = vperm.xlu0 %206, %v32
  %v208 = vpop.permute.xlu0 %207
  %210 = vset.pattern.permute.xlu0 1
  %211 = vperm.xlu0 %210, %v33
  %v212 = vpop.permute.xlu0 %211
  %214 = vset.pattern.permute.xlu0 1
  %215 = vperm.xlu0 %214, %v34
  %v216 = vpop.permute.xlu0 %215
  %218 = vset.pattern.permute.xlu0 1
  %219 = vperm.xlu0 %218, %v35
  %v220 = vpop.permute.xlu0 %219
  %222 = vset.pattern.permute.xlu0 1
  %223 = vperm.xlu0 %222, %v36
  %v224 = vpop.permute.xlu0 %223
  %226 = vset.pattern.permute.xlu0 1
  %227 = vperm.xlu0 %226, %v37
  %v228 = vpop.permute.xlu0 %227
  %230 = vset.pattern.permute.xlu0 1
  %231 = vperm.xlu0 %230, %v38
  %v232 = vpop.permute.xlu0 %231
  %v234 = vperm.slane %v169, 0
  %v235 = vsub.f32 %v172, %v234
  %v236 = vsub.f32 %v176, %v234
  %v237 = vsub.f32 %v180, %v234
  %v238 = vsub.f32 %v184, %v234
  %v239 = vsub.f32 %v188, %v234
  %v240 = vsub.f32 %v192, %v234
  %v241 = vsub.f32 %v196, %v234
  %v242 = vsub.f32 %v200, %v234
  %v243 = vsub.f32 %v204, %v234
  %v244 = vsub.f32 %v208, %v234
  %v245 = vsub.f32 %v212, %v234
  %v246 = vsub.f32 %v216, %v234
  %v247 = vsub.f32 %v220, %v234
  %v248 = vsub.f32 %v224, %v234
  %v249 = vsub.f32 %v228, %v234
  %v250 = vsub.f32 %v232, %v234
  %v251 = vmul.f32 %v235, %v235
  %v252 = vmul.f32 %v236, %v236
  %v253 = vmul.f32 %v237, %v237
  %v254 = vmul.f32 %v238, %v238
  %v255 = vmul.f32 %v239, %v239
  %v256 = vmul.f32 %v240, %v240
  %v257 = vmul.f32 %v241, %v241
  %v258 = vmul.f32 %v242, %v242
  %v259 = vmul.f32 %v243, %v243
  %v260 = vmul.f32 %v244, %v244
  %v261 = vmul.f32 %v245, %v245
  %v262 = vmul.f32 %v246, %v246
  %v263 = vmul.f32 %v247, %v247
  %v264 = vmul.f32 %v248, %v248
  %v265 = vmul.f32 %v249, %v249
  %v266 = vmul.f32 %v250, %v250
  %v267 = vadd.f32 %v153, %v251
  %v268 = vadd.f32 %v154, %v252
  %v269 = vadd.f32 %v155, %v253
  %v270 = vadd.f32 %v156, %v254
  %v271 = vadd.f32 %v157, %v255
  %v272 = vadd.f32 %v158, %v256
  %v273 = vadd.f32 %v159, %v257
  %v274 = vadd.f32 %v160, %v258
  %v275 = vadd.f32 %v161, %v259
  %v276 = vadd.f32 %v162, %v260
  %v277 = vadd.f32 %v163, %v261
  %v278 = vadd.f32 %v164, %v262
  %v279 = vadd.f32 %v165, %v263
  %v280 = vadd.f32 %v166, %v264
  %v281 = vadd.f32 %v167, %v265
  %v282 = vadd.f32 %v168, %v266
  %v283 = vld [vmem:[%s2] sm:$0xff]
  %v284 = vld [vmem:[%s2 + $0x8] sm:$0xff]
  %v285 = vld [vmem:[%s2 + $0x10] sm:$0xff]
  %v286 = vld [vmem:[%s2 + $0x18] sm:$0xff]
  %v287 = vld [vmem:[%s2 + $0x20] sm:$0xff]
  %v288 = vld [vmem:[%s2 + $0x28] sm:$0xff]
  %v289 = vld [vmem:[%s2 + $0x30] sm:$0xff]
  %v290 = vld [vmem:[%s2 + $0x38] sm:$0xff]
  %v291 = vld [vmem:[%s2 + $0x40] sm:$0xff]
  %v292 = vld [vmem:[%s2 + $0x48] sm:$0xff]
  %v293 = vld [vmem:[%s2 + $0x50] sm:$0xff]
  %v294 = vld [vmem:[%s2 + $0x58] sm:$0xff]
  %v295 = vld [vmem:[%s2 + $0x60] sm:$0xff]
  %v296 = vld [vmem:[%s2 + $0x68] sm:$0xff]
  %v297 = vld [vmem:[%s2 + $0x70] sm:$0xff]
  %v298 = vld [vmem:[%s2 + $0x78] sm:$0xff]
  %v299 = vld [vmem:[%s3] sm:$0x1]
  %301 = vset.pattern.permute.xlu0 0
  %302 = vperm.xlu0 %301, %v283
  %v303 = vpop.permute.xlu0 %302
  %306 = vset.pattern.permute.xlu0 0
  %307 = vperm.xlu0 %306, %v284
  %v308 = vpop.permute.xlu0 %307
  %311 = vset.pattern.permute.xlu0 0
  %312 = vperm.xlu0 %311, %v285
  %v313 = vpop.permute.xlu0 %312
  %316 = vset.pattern.permute.xlu0 0
  %317 = vperm.xlu0 %316, %v286
  %v318 = vpop.permute.xlu0 %317
  %321 = vset.pattern.permute.xlu0 0
  %322 = vperm.xlu0 %321, %v287
  %v323 = vpop.permute.xlu0 %322
  %326 = vset.pattern.permute.xlu0 0
  %327 = vperm.xlu0 %326, %v288
  %v328 = vpop.permute.xlu0 %327
  %331 = vset.pattern.permute.xlu0 0
  %332 = vperm.xlu0 %331, %v289
  %v333 = vpop.permute.xlu0 %332
  %336 = vset.pattern.permute.xlu0 0
  %337 = vperm.xlu0 %336, %v290
  %v338 = vpop.permute.xlu0 %337
  %341 = vset.pattern.permute.xlu0 0
  %342 = vperm.xlu0 %341, %v291
  %v343 = vpop.permute.xlu0 %342
  %346 = vset.pattern.permute.xlu0 0
  %347 = vperm.xlu0 %346, %v292
  %v348 = vpop.permute.xlu0 %347
  %351 = vset.pattern.permute.xlu0 0
  %352 = vperm.xlu0 %351, %v293
  %v353 = vpop.permute.xlu0 %352
  %356 = vset.pattern.permute.xlu0 0
  %357 = vperm.xlu0 %356, %v294
  %v358 = vpop.permute.xlu0 %357
  %361 = vset.pattern.permute.xlu0 0
  %362 = vperm.xlu0 %361, %v295
  %v363 = vpop.permute.xlu0 %362
  %366 = vset.pattern.permute.xlu0 0
  %367 = vperm.xlu0 %366, %v296
  %v368 = vpop.permute.xlu0 %367
  %371 = vset.pattern.permute.xlu0 0
  %372 = vperm.xlu0 %371, %v297
  %v373 = vpop.permute.xlu0 %372
  %376 = vset.pattern.permute.xlu0 0
  %377 = vperm.xlu0 %376, %v298
  %v378 = vpop.permute.xlu0 %377
  %v380 = vperm.slane %v299, 0
  %v381 = vsub.f32 %v303, %v380
  %v382 = vsub.f32 %v308, %v380
  %v383 = vsub.f32 %v313, %v380
  %v384 = vsub.f32 %v318, %v380
  %v385 = vsub.f32 %v323, %v380
  %v386 = vsub.f32 %v328, %v380
  %v387 = vsub.f32 %v333, %v380
  %v388 = vsub.f32 %v338, %v380
  %v389 = vsub.f32 %v343, %v380
  %v390 = vsub.f32 %v348, %v380
  %v391 = vsub.f32 %v353, %v380
  %v392 = vsub.f32 %v358, %v380
  %v393 = vsub.f32 %v363, %v380
  %v394 = vsub.f32 %v368, %v380
  %v395 = vsub.f32 %v373, %v380
  %v396 = vsub.f32 %v378, %v380
  %v397 = vmul.f32 %v381, %v381
  %v398 = vmul.f32 %v382, %v382
  %v399 = vmul.f32 %v383, %v383
  %v400 = vmul.f32 %v384, %v384
  %v401 = vmul.f32 %v385, %v385
  %v402 = vmul.f32 %v386, %v386
  %v403 = vmul.f32 %v387, %v387
  %v404 = vmul.f32 %v388, %v388
  %v405 = vmul.f32 %v389, %v389
  %v406 = vmul.f32 %v390, %v390
  %v407 = vmul.f32 %v391, %v391
  %v408 = vmul.f32 %v392, %v392
  %v409 = vmul.f32 %v393, %v393
  %v410 = vmul.f32 %v394, %v394
  %v411 = vmul.f32 %v395, %v395
  %v412 = vmul.f32 %v396, %v396
  %v413 = vadd.f32 %v267, %v397
  %v414 = vadd.f32 %v268, %v398
  %v415 = vadd.f32 %v269, %v399
  %v416 = vadd.f32 %v270, %v400
  %v417 = vadd.f32 %v271, %v401
  %v418 = vadd.f32 %v272, %v402
  %v419 = vadd.f32 %v273, %v403
  %v420 = vadd.f32 %v274, %v404
  %v421 = vadd.f32 %v275, %v405
  %v422 = vadd.f32 %v276, %v406
  %v423 = vadd.f32 %v277, %v407
  %v424 = vadd.f32 %v278, %v408
  %v425 = vadd.f32 %v279, %v409
  %v426 = vadd.f32 %v280, %v410
  %v427 = vadd.f32 %v281, %v411
  %v428 = vadd.f32 %v282, %v412
  %v429 = vld [vmem:[%s3 + $0x1] sm:$0x1]
  %430 = vset.pattern.permute.xlu0 1
  %431 = vperm.xlu0 %430, %v283
  %v432 = vpop.permute.xlu0 %431
  %434 = vset.pattern.permute.xlu0 1
  %435 = vperm.xlu0 %434, %v284
  %v436 = vpop.permute.xlu0 %435
  %438 = vset.pattern.permute.xlu0 1
  %439 = vperm.xlu0 %438, %v285
  %v440 = vpop.permute.xlu0 %439
  %442 = vset.pattern.permute.xlu0 1
  %443 = vperm.xlu0 %442, %v286
  %v444 = vpop.permute.xlu0 %443
  %446 = vset.pattern.permute.xlu0 1
  %447 = vperm.xlu0 %446, %v287
  %v448 = vpop.permute.xlu0 %447
  %450 = vset.pattern.permute.xlu0 1
  %451 = vperm.xlu0 %450, %v288
  %v452 = vpop.permute.xlu0 %451
  %454 = vset.pattern.permute.xlu0 1
  %455 = vperm.xlu0 %454, %v289
  %v456 = vpop.permute.xlu0 %455
  %458 = vset.pattern.permute.xlu0 1
  %459 = vperm.xlu0 %458, %v290
  %v460 = vpop.permute.xlu0 %459
  %462 = vset.pattern.permute.xlu0 1
  %463 = vperm.xlu0 %462, %v291
  %v464 = vpop.permute.xlu0 %463
  %466 = vset.pattern.permute.xlu0 1
  %467 = vperm.xlu0 %466, %v292
  %v468 = vpop.permute.xlu0 %467
  %470 = vset.pattern.permute.xlu0 1
  %471 = vperm.xlu0 %470, %v293
  %v472 = vpop.permute.xlu0 %471
  %474 = vset.pattern.permute.xlu0 1
  %475 = vperm.xlu0 %474, %v294
  %v476 = vpop.permute.xlu0 %475
  %478 = vset.pattern.permute.xlu0 1
  %479 = vperm.xlu0 %478, %v295
  %v480 = vpop.permute.xlu0 %479
  %482 = vset.pattern.permute.xlu0 1
  %483 = vperm.xlu0 %482, %v296
  %v484 = vpop.permute.xlu0 %483
  %486 = vset.pattern.permute.xlu0 1
  %487 = vperm.xlu0 %486, %v297
  %v488 = vpop.permute.xlu0 %487
  %490 = vset.pattern.permute.xlu0 1
  %491 = vperm.xlu0 %490, %v298
  %v492 = vpop.permute.xlu0 %491
  %v494 = vperm.slane %v429, 0
  %v495 = vsub.f32 %v432, %v494
  %v496 = vsub.f32 %v436, %v494
  %v497 = vsub.f32 %v440, %v494
  %v498 = vsub.f32 %v444, %v494
  %v499 = vsub.f32 %v448, %v494
  %v500 = vsub.f32 %v452, %v494
  %v501 = vsub.f32 %v456, %v494
  %v502 = vsub.f32 %v460, %v494
  %v503 = vsub.f32 %v464, %v494
  %v504 = vsub.f32 %v468, %v494
  %v505 = vsub.f32 %v472, %v494
  %v506 = vsub.f32 %v476, %v494
  %v507 = vsub.f32 %v480, %v494
  %v508 = vsub.f32 %v484, %v494
  %v509 = vsub.f32 %v488, %v494
  %v510 = vsub.f32 %v492, %v494
  %v511 = vmul.f32 %v495, %v495
  %v512 = vmul.f32 %v496, %v496
  %v513 = vmul.f32 %v497, %v497
  %v514 = vmul.f32 %v498, %v498
  %v515 = vmul.f32 %v499, %v499
  %v516 = vmul.f32 %v500, %v500
  %v517 = vmul.f32 %v501, %v501
  %v518 = vmul.f32 %v502, %v502
  %v519 = vmul.f32 %v503, %v503
  %v520 = vmul.f32 %v504, %v504
  %v521 = vmul.f32 %v505, %v505
  %v522 = vmul.f32 %v506, %v506
  %v523 = vmul.f32 %v507, %v507
  %v524 = vmul.f32 %v508, %v508
  %v525 = vmul.f32 %v509, %v509
  %v526 = vmul.f32 %v510, %v510
  %v527 = vadd.f32 %v413, %v511
  %v528 = vadd.f32 %v414, %v512
  %v529 = vadd.f32 %v415, %v513
  %v530 = vadd.f32 %v416, %v514
  %v531 = vadd.f32 %v417, %v515
  %v532 = vadd.f32 %v418, %v516
  %v533 = vadd.f32 %v419, %v517
  %v534 = vadd.f32 %v420, %v518
  %v535 = vadd.f32 %v421, %v519
  %v536 = vadd.f32 %v422, %v520
  %v537 = vadd.f32 %v423, %v521
  %v538 = vadd.f32 %v424, %v522
  %v539 = vadd.f32 %v425, %v523
  %v540 = vadd.f32 %v426, %v524
  %v541 = vadd.f32 %v427, %v525
  %v542 = vadd.f32 %v428, %v526
  %v543 = vld [vmem:[%s3 + $0x2] sm:$0x1]
  %544 = vset.pattern.permute.xlu0 2
  %545 = vperm.xlu0 %544, %v283
  %v546 = vpop.permute.xlu0 %545
  %548 = vset.pattern.permute.xlu0 2
  %549 = vperm.xlu0 %548, %v284
  %v550 = vpop.permute.xlu0 %549
  %552 = vset.pattern.permute.xlu0 2
  %553 = vperm.xlu0 %552, %v285
  %v554 = vpop.permute.xlu0 %553
  %556 = vset.pattern.permute.xlu0 2
  %557 = vperm.xlu0 %556, %v286
  %v558 = vpop.permute.xlu0 %557
  %560 = vset.pattern.permute.xlu0 2
  %561 = vperm.xlu0 %560, %v287
  %v562 = vpop.permute.xlu0 %561
  %564 = vset.pattern.permute.xlu0 2
  %565 = vperm.xlu0 %564, %v288
  %v566 = vpop.permute.xlu0 %565
  %568 = vset.pattern.permute.xlu0 2
  %569 = vperm.xlu0 %568, %v289
  %v570 = vpop.permute.xlu0 %569
  %572 = vset.pattern.permute.xlu0 2
  %573 = vperm.xlu0 %572, %v290
  %v574 = vpop.permute.xlu0 %573
  %576 = vset.pattern.permute.xlu0 2
  %577 = vperm.xlu0 %576, %v291
  %v578 = vpop.permute.xlu0 %577
  %580 = vset.pattern.permute.xlu0 2
  %581 = vperm.xlu0 %580, %v292
  %v582 = vpop.permute.xlu0 %581
  %584 = vset.pattern.permute.xlu0 2
  %585 = vperm.xlu0 %584, %v293
  %v586 = vpop.permute.xlu0 %585
  %588 = vset.pattern.permute.xlu0 2
  %589 = vperm.xlu0 %588, %v294
  %v590 = vpop.permute.xlu0 %589
  %592 = vset.pattern.permute.xlu0 2
  %593 = vperm.xlu0 %592, %v295
  %v594 = vpop.permute.xlu0 %593
  %596 = vset.pattern.permute.xlu0 2
  %597 = vperm.xlu0 %596, %v296
  %v598 = vpop.permute.xlu0 %597
  %600 = vset.pattern.permute.xlu0 2
  %601 = vperm.xlu0 %600, %v297
  %v602 = vpop.permute.xlu0 %601
  %604 = vset.pattern.permute.xlu0 2
  %605 = vperm.xlu0 %604, %v298
  %v606 = vpop.permute.xlu0 %605
  %v608 = vperm.slane %v543, 0
  %v609 = vsub.f32 %v546, %v608
  %v610 = vsub.f32 %v550, %v608
  %v611 = vsub.f32 %v554, %v608
  %v612 = vsub.f32 %v558, %v608
  %v613 = vsub.f32 %v562, %v608
  %v614 = vsub.f32 %v566, %v608
  %v615 = vsub.f32 %v570, %v608
  %v616 = vsub.f32 %v574, %v608
  %v617 = vsub.f32 %v578, %v608
  %v618 = vsub.f32 %v582, %v608
  %v619 = vsub.f32 %v586, %v608
  %v620 = vsub.f32 %v590, %v608
  %v621 = vsub.f32 %v594, %v608
  %v622 = vsub.f32 %v598, %v608
  %v623 = vsub.f32 %v602, %v608
  %v624 = vsub.f32 %v606, %v608
  %v625 = vmul.f32 %v609, %v609
  %v626 = vmul.f32 %v610, %v610
  %v627 = vmul.f32 %v611, %v611
  %v628 = vmul.f32 %v612, %v612
  %v629 = vmul.f32 %v613, %v613
  %v630 = vmul.f32 %v614, %v614
  %v631 = vmul.f32 %v615, %v615
  %v632 = vmul.f32 %v616, %v616
  %v633 = vmul.f32 %v617, %v617
  %v634 = vmul.f32 %v618, %v618
  %v635 = vmul.f32 %v619, %v619
  %v636 = vmul.f32 %v620, %v620
  %v637 = vmul.f32 %v621, %v621
  %v638 = vmul.f32 %v622, %v622
  %v639 = vmul.f32 %v623, %v623
  %v640 = vmul.f32 %v624, %v624
  %v641 = vadd.f32 %v527, %v625
  %v642 = vadd.f32 %v528, %v626
  %v643 = vadd.f32 %v529, %v627
  %v644 = vadd.f32 %v530, %v628
  %v645 = vadd.f32 %v531, %v629
  %v646 = vadd.f32 %v532, %v630
  %v647 = vadd.f32 %v533, %v631
  %v648 = vadd.f32 %v534, %v632
  %v649 = vadd.f32 %v535, %v633
  %v650 = vadd.f32 %v536, %v634
  %v651 = vadd.f32 %v537, %v635
  %v652 = vadd.f32 %v538, %v636
  %v653 = vadd.f32 %v539, %v637
  %v654 = vadd.f32 %v540, %v638
  %v655 = vadd.f32 %v541, %v639
  %v656 = vadd.f32 %v542, %v640
  %v657 = vmul.f32 %v641, -0.5
  %v658 = vmul.f32 %v642, -0.5
  %v659 = vmul.f32 %v643, -0.5
  %v660 = vmul.f32 %v644, -0.5
  %v661 = vmul.f32 %v645, -0.5
  %v662 = vmul.f32 %v646, -0.5
  %v663 = vmul.f32 %v647, -0.5
  %v664 = vmul.f32 %v648, -0.5
  %v665 = vmul.f32 %v649, -0.5
  %v666 = vmul.f32 %v650, -0.5
  %v667 = vmul.f32 %v651, -0.5
  %v668 = vmul.f32 %v652, -0.5
  %v669 = vmul.f32 %v653, -0.5
  %v670 = vmul.f32 %v654, -0.5
  %v671 = vmul.f32 %v655, -0.5
  %v672 = vmul.f32 %v656, -0.5
  %v673 = vmul.f32 %v657, 1.442695
  %v674 = vpow.pop %v673
  %v675 = vmul.f32 %v658, 1.442695
  %v676 = vpow.pop %v675
  %v677 = vmul.f32 %v659, 1.442695
  %v678 = vpow.pop %v677
  %v679 = vmul.f32 %v660, 1.442695
  %v680 = vpow.pop %v679
  %v681 = vmul.f32 %v661, 1.442695
  %v682 = vpow.pop %v681
  %v683 = vmul.f32 %v662, 1.442695
  %v684 = vpow.pop %v683
  %v685 = vmul.f32 %v663, 1.442695
  %v686 = vpow.pop %v685
  %v687 = vmul.f32 %v664, 1.442695
  %v688 = vpow.pop %v687
  %v689 = vmul.f32 %v665, 1.442695
  %v690 = vpow.pop %v689
  %v691 = vmul.f32 %v666, 1.442695
  %v692 = vpow.pop %v691
  %v693 = vmul.f32 %v667, 1.442695
  %v694 = vpow.pop %v693
  %v695 = vmul.f32 %v668, 1.442695
  %v696 = vpow.pop %v695
  %v697 = vmul.f32 %v669, 1.442695
  %v698 = vpow.pop %v697
  %v699 = vmul.f32 %v670, 1.442695
  %v700 = vpow.pop %v699
  %v701 = vmul.f32 %v671, 1.442695
  %v702 = vpow.pop %v701
  %v703 = vmul.f32 %v672, 1.442695
  %v704 = vpow.pop %v703
  %v705 = vld [vmem:[%s4] sm:$0xff]
  %v706 = vld [vmem:[%s4 + $0x8] sm:$0xff]
  %v707 = vld [vmem:[%s4 + $0x10] sm:$0xff]
  %v708 = vld [vmem:[%s4 + $0x18] sm:$0xff]
  %v709 = vld [vmem:[%s5] sm:$0xff]
  %v710 = vld [vmem:[%s5 + $0x8] sm:$0xff]
  %v711 = vld [vmem:[%s5 + $0x10] sm:$0xff]
  %v712 = vld [vmem:[%s5 + $0x18] sm:$0xff]
  %713 = vxpose.xlu0.b32.start [1/16] %v705, 128
  %714 = vxpose.xlu0.b32.cont [2/16] %v706, 128
  %715 = vxpose.xlu0.b32.cont [3/16] %v707, 128
  %716 = vxpose.xlu0.b32.cont [4/16] %v708, 128
  %717 = vxpose.xlu0.b32.cont [5/16] 0.0, 128
  %718 = vxpose.xlu0.b32.cont [6/16] 0.0, 128
  %719 = vxpose.xlu0.b32.cont [7/16] 0.0, 128
  %720 = vxpose.xlu0.b32.cont [8/16] 0.0, 128
  %721 = vxpose.xlu0.b32.cont [9/16] 0.0, 128
  %722 = vxpose.xlu0.b32.cont [10/16] 0.0, 128
  %723 = vxpose.xlu0.b32.cont [11/16] 0.0, 128
  %724 = vxpose.xlu0.b32.cont [12/16] 0.0, 128
  %725 = vxpose.xlu0.b32.cont [13/16] 0.0, 128
  %726 = vxpose.xlu0.b32.cont [14/16] 0.0, 128
  %727 = vxpose.xlu0.b32.cont [15/16] 0.0, 128
  %728 = vxpose.xlu0.b32.end [16/16] 0.0, 128
  %v729 = vpop.trf.xlu0
  %v730 = vpop.trf.xlu0
  %v731 = vpop.trf.xlu0
  %v732 = vpop.trf.xlu0
  %v733 = vpop.trf.xlu0
  %v734 = vpop.trf.xlu0
  %v735 = vpop.trf.xlu0
  %v736 = vpop.trf.xlu0
  %v737 = vpop.trf.xlu0
  %v738 = vpop.trf.xlu0
  %v739 = vpop.trf.xlu0
  %v740 = vpop.trf.xlu0
  %v741 = vpop.trf.xlu0
  %v742 = vpop.trf.xlu0
  %v743 = vpop.trf.xlu0
  %v744 = vpop.trf.xlu0
  %vm745 = vcmask 261120
  %v747 = vsel %vm745, %v729, 0
  %v750 = vsel %vm745, %v730, 0
  %v753 = vsel %vm745, %v731, 0
  %v756 = vsel %vm745, %v732, 0
  %v759 = vsel %vm745, %v733, 0
  %v762 = vsel %vm745, %v734, 0
  %v765 = vsel %vm745, %v735, 0
  %v768 = vsel %vm745, %v736, 0
  %v771 = vsel %vm745, %v737, 0
  %v774 = vsel %vm745, %v738, 0
  %v777 = vsel %vm745, %v739, 0
  %v780 = vsel %vm745, %v740, 0
  %v783 = vsel %vm745, %v741, 0
  %v786 = vsel %vm745, %v742, 0
  %v789 = vsel %vm745, %v743, 0
  %v792 = vsel %vm745, %v744, 0
  %794 = vmatpush.msra.mxu0 0.0
  %795 = vmatpush.msra.mxu0 0.0
  %796 = vmatpush.msra.mxu0 0.0
  %797 = vmatpush.msra.mxu0 0.0
  %798 = vmatpush.msra.mxu0 0.0
  %799 = vmatpush.msra.mxu0 0.0
  %800 = vmatpush.msra.mxu0 0.0
  %801 = vmatpush.msra.mxu0 0.0
  %802 = vmatpush.msra.mxu0 0.0
  %803 = vmatpush.msra.mxu0 0.0
  %804 = vmatpush.msra.mxu0 0.0
  %805 = vmatpush.msra.mxu0 0.0
  %806 = vmatpush.msra.mxu0 %v712
  %807 = vmatpush.msra.mxu0 %v711
  %808 = vmatpush.msra.mxu0 %v710
  %809 = vmatpush.msra.mxu0 %v709
  %810 = vmatmul.f32.gmra.mxu0 %v747
  %v811 = vpop.f32.mrf.mxu0
  %v812 = vadd.f32 0.0, %v811
  %813 = vmatmul.f32.gmra.mxu0 %v750
  %v814 = vpop.f32.mrf.mxu0
  %v815 = vadd.f32 0.0, %v814
  %816 = vmatmul.f32.gmra.mxu0 %v753
  %v817 = vpop.f32.mrf.mxu0
  %v818 = vadd.f32 0.0, %v817
  %819 = vmatmul.f32.gmra.mxu0 %v756
  %v820 = vpop.f32.mrf.mxu0
  %v821 = vadd.f32 0.0, %v820
  %822 = vmatmul.f32.gmra.mxu0 %v759
  %v823 = vpop.f32.mrf.mxu0
  %v824 = vadd.f32 0.0, %v823
  %825 = vmatmul.f32.gmra.mxu0 %v762
  %v826 = vpop.f32.mrf.mxu0
  %v827 = vadd.f32 0.0, %v826
  %828 = vmatmul.f32.gmra.mxu0 %v765
  %v829 = vpop.f32.mrf.mxu0
  %v830 = vadd.f32 0.0, %v829
  %831 = vmatmul.f32.gmra.mxu0 %v768
  %v832 = vpop.f32.mrf.mxu0
  %v833 = vadd.f32 0.0, %v832
  %834 = vmatmul.f32.gmra.mxu0 %v771
  %v835 = vpop.f32.mrf.mxu0
  %v836 = vadd.f32 0.0, %v835
  %837 = vmatmul.f32.gmra.mxu0 %v774
  %v838 = vpop.f32.mrf.mxu0
  %v839 = vadd.f32 0.0, %v838
  %840 = vmatmul.f32.gmra.mxu0 %v777
  %v841 = vpop.f32.mrf.mxu0
  %v842 = vadd.f32 0.0, %v841
  %843 = vmatmul.f32.gmra.mxu0 %v780
  %v844 = vpop.f32.mrf.mxu0
  %v845 = vadd.f32 0.0, %v844
  %846 = vmatmul.f32.gmra.mxu0 %v783
  %v847 = vpop.f32.mrf.mxu0
  %v848 = vadd.f32 0.0, %v847
  %849 = vmatmul.f32.gmra.mxu0 %v786
  %v850 = vpop.f32.mrf.mxu0
  %v851 = vadd.f32 0.0, %v850
  %852 = vmatmul.f32.gmra.mxu0 %v789
  %v853 = vpop.f32.mrf.mxu0
  %v854 = vadd.f32 0.0, %v853
  %855 = vmatmul.f32.gmra.mxu0 %v792
  %v856 = vpop.f32.mrf.mxu0
  %v857 = vadd.f32 0.0, %v856
  %858 = vdwg.mxu0
  %v859 = vadd.f32 %v674, %v812
  %v860 = vadd.f32 %v676, %v815
  %v861 = vadd.f32 %v678, %v818
  %v862 = vadd.f32 %v680, %v821
  %v863 = vadd.f32 %v682, %v824
  %v864 = vadd.f32 %v684, %v827
  %v865 = vadd.f32 %v686, %v830
  %v866 = vadd.f32 %v688, %v833
  %v867 = vadd.f32 %v690, %v836
  %v868 = vadd.f32 %v692, %v839
  %v869 = vadd.f32 %v694, %v842
  %v870 = vadd.f32 %v696, %v845
  %v871 = vadd.f32 %v698, %v848
  %v872 = vadd.f32 %v700, %v851
  %v873 = vadd.f32 %v702, %v854
  %v874 = vadd.f32 %v704, %v857
  %875 = vst [vmem:[%s6] sm:$0xff] %v859
  %876 = vst [vmem:[%s6 + $0x8] sm:$0xff] %v860
  %877 = vst [vmem:[%s6 + $0x10] sm:$0xff] %v861
  %878 = vst [vmem:[%s6 + $0x18] sm:$0xff] %v862
  %879 = vst [vmem:[%s6 + $0x20] sm:$0xff] %v863
  %880 = vst [vmem:[%s6 + $0x28] sm:$0xff] %v864
  %881 = vst [vmem:[%s6 + $0x30] sm:$0xff] %v865
  %882 = vst [vmem:[%s6 + $0x38] sm:$0xff] %v866
  %883 = vst [vmem:[%s6 + $0x40] sm:$0xff] %v867
  %884 = vst [vmem:[%s6 + $0x48] sm:$0xff] %v868
  %885 = vst [vmem:[%s6 + $0x50] sm:$0xff] %v869
  %886 = vst [vmem:[%s6 + $0x58] sm:$0xff] %v870
  %887 = vst [vmem:[%s6 + $0x60] sm:$0xff] %v871
  %888 = vst [vmem:[%s6 + $0x68] sm:$0xff] %v872
  %889 = vst [vmem:[%s6 + $0x70] sm:$0xff] %v873
  %890 = vst [vmem:[%s6 + $0x78] sm:$0xff] %v874
  // Predicated region
  $region26: #{kronecker_variational_strategy_forward.11} parent=0 // pred_check
    _
  $region27: #{kronecker_variational_strategy_forward.11} parent=0 // pred_check_branch
    %892 = sbr.rel (0) target = $region29
  $region28: #{kronecker_variational_strategy_forward.11} parent=0 // pred_region
    _
  $region29: #{kronecker_variational_strategy_forward.11} parent=0 // pred_fallthru
    _
  // Predicated region
  $region30: #{kronecker_variational_strategy_forward.11} parent=0 // pred_check
    _
  $region31: #{kronecker_variational_strategy_forward.11} parent=0 // pred_check_branch
    %894 = sbr.rel (0) target = $region33
  $region32: #{kronecker_variational_strategy_forward.11} parent=0 // pred_region
    _
  $region33: #{kronecker_variational_strategy_forward.11} parent=0 // pred_fallthru
    _

</llo_original>
